<compile_context>
chip_gen: v7x
topology: tpu7x:2x2x1
jax: 0.10.0
libtpu: 0.0.40
codegen_flags: <defaults>
</compile_context>

<pallas_src>
import jax
import jax.numpy as jnp
from jax import lax
from jax.experimental import pallas as pl
from jax.experimental.pallas import tpu as pltpu

PAD = 3      # replication pad (kernel=5, dilation=1) -> pad_l = pad_r = 3
K1 = 5       # first conv kernel size
K2 = 3       # second conv kernel size
NEG_SLOPE = 0.01

# branch indices inside the stacked parameter tensors
PHI, PSI, UU, PP = 0, 1, 2, 3

_MAX_BLOCK_B = 8   # bounds trace-time unrolling + VMEM per grid step


# --------------------------- kernel-side helpers ---------------------------
def _im2col_rows(rows, n_batch, t_in, k, pad, mm_dtype):
    """Row-stacked im2col for a stride-1 Conv1d with per-batch replication pad.

    rows : (n_batch * t_in, Din) batch-major activation slab.
    Returns (n_batch * t_out, k * Din) with t_out = t_in + 2*pad - k + 1.
    The cast to the MXU dtype happens once, before the slice/concat shuffles.
    """
    din = rows.shape[-1]
    t_out = t_in + 2 * pad - k + 1
    rows = rows.astype(mm_dtype)
    per_batch = []
    for b in range(n_batch):          # trace-time only: builds slices, no matmuls
        xb = rows[b * t_in:(b + 1) * t_in, :]
        if pad:
            head = jnp.broadcast_to(xb[0:1, :], (pad, din))
            tail = jnp.broadcast_to(xb[t_in - 1:t_in, :], (pad, din))
            xb = jnp.concatenate([head, xb, tail], axis=0)       # (t_in+2*pad, Din)
        taps = [xb[j:j + t_out, :] for j in range(k)]
        per_batch.append(jnp.concatenate(taps, axis=-1))         # (t_out, k*Din)
    if n_batch == 1:
        return per_batch[0]
    return jnp.concatenate(per_batch, axis=0)                    # (n_batch*t_out, k*Din)


def _branch_pair(rows, n_batch, t_len, w1, b1, w2, b2):
    """Fused pair of conv branches on a row-stacked (n_batch*t_len, D) slab.

    One matmul per conv for the WHOLE batch block (M = n_batch * T1).
    Returns (n_batch*t_len, Dout) f32 = tanh(conv2(lrelu(conv1(rep_pad(rows))))).
    """
    mm = w1.dtype
    t_mid = t_len + 2 * PAD - K1 + 1                             # = t_len + 2

    cols = _im2col_rows(rows, n_batch, t_len, K1, PAD, mm)       # (M1, K1*D)
    y = jnp.dot(cols, w1, preferred_element_type=jnp.float32) + b1
    y = jnp.where(y > 0, y, NEG_SLOPE * y)                       # LeakyReLU, f32
    # TODO(synk): Dropout(0.5) is identity here (inference / eval mode).

    cols = _im2col_rows(y, n_batch, t_mid, K2, 0, mm)            # (M2, K2*H)
    z = jnp.dot(cols, w2, preferred_element_type=jnp.float32) + b2
    return jnp.tanh(z)                                           # (n_batch*t_len, Dout)


def _interactor_kernel(x_ref, w1g_ref, b1g_ref, w2g_ref, b2g_ref,
                       w1u_ref, b1u_ref, w2u_ref, b2u_ref, out_ref):
    """One grid step: a (block_b, T, 2C) slab of fused [even|odd] activations."""
    n_b, t_len, _ = x_ref.shape

    # Row-stack the batch block (batch-major rows) -> single matmuls below.
    if n_b > 1:
        x_rows = jnp.concatenate([x_ref[b] for b in range(n_b)], axis=0)
    else:
        x_rows = x_ref[0]                                        # (n_b*T, 2C)

    # Gate pair (anti-block-diagonal f32 weights): t1 = [psi(x_odd) | phi(x_even)]
    t1 = _branch_pair(x_rows, n_b, t_len,
                      w1g_ref[...], b1g_ref[...], w2g_ref[...], b2g_ref[...])
    x2 = x_rows * jnp.exp(t1)                                    # = [c | d], f32

    # Update pair (anti-block-diagonal, P's last conv negated): t2 = [U(d) | -P(c)]
    t2 = _branch_pair(x2, n_b, t_len,
                      w1u_ref[...], b1u_ref[...], w2u_ref[...], b2u_ref[...])
    upd = x2 + t2                                                # [c+U(d) | d-P(c)]

    # Lane-dense store: flatten each batch row-block (T, 2C) onto T*2C lanes.
    flat = []
    for b in range(n_b):
        rb = upd[b * t_len:(b + 1) * t_len, :]
        flat.append(jnp.concatenate([rb[t:t + 1, :] for t in range(t_len)],
                                    axis=-1))                    # (1, T*2C)
    out_ref[...] = jnp.concatenate(flat, axis=0) if n_b > 1 else flat[0]


# ----------------------------- wrapper helpers -----------------------------
def _cross_block(w_from_hi, w_from_lo):
    """Anti-block-diagonal im2col weight (K*2Ci, 2Co).

    On the lane-fused input [x_lo | x_hi]:
      out[:, :Co] = conv(x_hi, w_from_hi),  out[:, Co:] = conv(x_lo, w_from_lo).
    """
    k, ci, co = w_from_hi.shape
    z = jnp.zeros((k, ci, co), w_from_hi.dtype)
    lo_rows = jnp.concatenate([z, w_from_lo], axis=-1)   # x_lo lanes -> last Co cols
    hi_rows = jnp.concatenate([w_from_hi, z], axis=-1)   # x_hi lanes -> first Co cols
    return jnp.concatenate([lo_rows, hi_rows], axis=1).reshape(k * 2 * ci, 2 * co)


def _diag_block(w_lo, w_hi):
    """Block-diagonal im2col weight (K*2Ci, 2Co): halves stay in their lanes."""
    k, ci, co = w_lo.shape
    z = jnp.zeros((k, ci, co), w_lo.dtype)
    lo_rows = jnp.concatenate([w_lo, z], axis=-1)
    hi_rows = jnp.concatenate([z, w_hi], axis=-1)
    return jnp.concatenate([lo_rows, hi_rows], axis=1).reshape(k * 2 * ci, 2 * co)


def _pack_pair_params(params, use_bf16):
    """Build the two fused branch-pair weight sets.

    Gate pair (phi||psi) stays f32 (its output feeds exp(), which amplifies
    bf16 error); update pair (U||P) may use bf16 MXU operands.  The half-swap
    and the minus sign of P are folded into the weights (tanh is odd).
    """
    w1s, b1s, w2s, b2s = params
    f32 = jnp.float32
    upd_dt = jnp.bfloat16 if use_bf16 else f32

    # gate pair: input [xe | xo] -> [psi(xo) | phi(xe)]
    w1g = _cross_block(w1s[PSI], w1s[PHI]).astype(f32)
    b1g = jnp.concatenate([b1s[PSI], b1s[PHI]], axis=-1).astype(f32)
    w2g = _diag_block(w2s[PSI], w2s[PHI]).astype(f32)
    b2g = jnp.concatenate([b2s[PSI], b2s[PHI]], axis=-1).astype(f32)

    # update pair: input [c | d] -> [U(d) | -P(c)]   (P negated at its last conv)
    w1u = _cross_block(w1s[UU], w1s[PP]).astype(upd_dt)
    b1u = jnp.concatenate([b1s[UU], b1s[PP]], axis=-1).astype(f32)
    w2u = _diag_block(w2s[UU], -w2s[PP]).astype(upd_dt)
    b2u = jnp.concatenate([b2s[UU], -b2s[PP]], axis=-1).astype(f32)

    return (w1g, b1g, w2g, b2g, w1u, b1u, w2u, b2u)


def _tpu_info():
    try:
        return pltpu.get_tpu_info()
    except Exception:
        return None


def _num_tensorcores(info):
    """Best-effort TensorCores-per-chip (v7x = 2); defaults to 1 (v5e/v6e)."""
    if info is None:
        return 1
    for attr in ("tensor_cores_per_chip", "cores_per_chip", "num_cores",
                 "num_tensorcores", "core_count"):
        v = getattr(info, attr, None)
        if isinstance(v, int) and 0 < v <= 8:
            return v
    return 1


def _default_block_b(B, num_cores):
    divisors = [d for d in range(1, min(B, _MAX_BLOCK_B) + 1) if B % d == 0]
    if num_cores <= 1:
        # Single-TC chips: the grid is a serial loop -> fewest, fattest steps.
        return divisors[-1]
    # Multi-TC (v7x): largest block that keeps grid_b a multiple of the core
    # count so the "parallel" batch axis splits evenly across TensorCores.
    for d in reversed(divisors):
        if (B // d) % num_cores == 0:
            return d
    return divisors[-1]


def _vmem_limit_bytes(block_b, T, D, H, use_bf16, info):
    """Explicit VMEM budget, capped against queried capacity (v7x = 64 MiB)."""
    T1 = T + 2 * PAD - K1 + 1
    wbytes = 2 if use_bf16 else 4
    io = 2 * 2 * (block_b * T * D * 4)                          # dbl-buffered in+out
    weights = 2 * (K1 * D * H + K2 * H * D) * wbytes + 2 * (H + D) * 4
    inter = block_b * (T1 * K1 * D + T1 * H + T * K2 * H + 6 * T * D) * 4
    est = io + weights + inter
    cap = 48 << 20
    if info is not None:
        vc = getattr(info, "vmem_capacity_bytes", None)
        if isinstance(vc, int) and vc > 0:
            cap = min(cap, int(vc * 0.45))
    return int(min(cap, max(16 << 20, 8 * est)))


def interactor_pallas_fused(x_pair, params, *, block_b=None, use_bf16=True):
    """Fused-layout entry point for stacked Interactor layers.

    x_pair: (B, T, 2C) f32 holding [x_even | x_odd] on the lane axis.
    Returns (B, T, 2C) holding [even_update | odd_update] - carry this layout
    between layers so no HBM concat/slice passes are paid per call.
    """
    B, T, D = x_pair.shape
    w1s = params[0]
    Ch = w1s.shape[-1]
    H = 2 * Ch

    packed = _pack_pair_params(params, use_bf16)

    info = _tpu_info()
    num_cores = _num_tensorcores(info)
    if block_b is None:
        block_b = _default_block_b(B, num_cores)
    assert B % block_b == 0, "block_b must divide the batch size"
    grid_b = B // block_b

    x_pair = x_pair.astype(jnp.float32)

    def _const2(*_):
        return (0, 0)

    x_spec = pl.BlockSpec((block_b, T, D), lambda b: (b, 0, 0))
    out_spec = pl.BlockSpec((block_b, T * D), lambda b: (b, 0))
    weight_specs = [pl.BlockSpec(a.shape, _const2) for a in packed]

    T1 = T + 2 * PAD - K1 + 1
    wbytes = 2 if use_bf16 else 4
    cost = pl.CostEstimate(
        flops=int(B * 2 * (2 * T1 * (K1 * D) * H + 2 * T * (K2 * H) * D)),
        transcendentals=int(B * 3 * T * D),
        bytes_accessed=int(2 * B * T * D * 4
                           + 2 * (K1 * D * H + K2 * H * D) * wbytes
                           + 2 * (H + D) * 4),
    )

    out_flat = pl.pallas_call(
        _interactor_kernel,
        out_shape=jax.ShapeDtypeStruct((B, T * D), jnp.float32),
        grid=(grid_b,),
        in_specs=[x_spec] + weight_specs,
        out_specs=out_spec,
        compiler_params=pltpu.CompilerParams(
            dimension_semantics=("parallel",),
            vmem_limit_bytes=_vmem_limit_bytes(block_b, T, D, H, use_bf16, info)),
        cost_estimate=cost,
    )(x_pair, *packed)

    # (B, T*2C) and (B, T, 2C) share the same HBM layout -> free reshape.
    return out_flat.reshape(B, T, D)


def interactor_pallas(x_even, x_odd, params, **kwargs):
    """Convenience (x_even, x_odd) API.  Prefer `interactor_pallas_fused` when
    stacking layers, to avoid the wrapper concat/slice HBM passes."""
    C = x_even.shape[-1]
    x_pair = jnp.concatenate([x_even, x_odd], axis=-1)
    out = interactor_pallas_fused(x_pair, params, **kwargs)
    return out[..., :C], out[..., C:]


# ---------------- plain-JAX reference (for verification) ----------------
def _ref_branch(x, w1, b1, w2, b2):
    # x: (B, T, C); w1: (K1, C, Ch) WIO layout; b1: (1, Ch); etc.
    xp = jnp.pad(x, ((0, 0), (PAD, PAD), (0, 0)), mode="edge")
    dn = ("NWC", "WIO", "NWC")
    y = lax.conv_general_dilated(xp, w1, window_strides=(1,),
                                 padding="VALID", dimension_numbers=dn)
    y = y + b1[None]
    y = jnp.where(y > 0, y, NEG_SLOPE * y)
    z = lax.conv_general_dilated(y, w2, window_strides=(1,),
                                 padding="VALID", dimension_numbers=dn)
    z = z + b2[None]
    return jnp.tanh(z)


def interactor_ref(x_even, x_odd, params):
    w1s, b1s, w2s, b2s = params
    phi_e = _ref_branch(x_even, w1s[PHI], b1s[PHI], w2s[PHI], b2s[PHI])
    psi_o = _ref_branch(x_odd, w1s[PSI], b1s[PSI], w2s[PSI], b2s[PSI])
    d = x_odd * jnp.exp(phi_e)
    c = x_even * jnp.exp(psi_o)
    even_out = c + _ref_branch(d, w1s[UU], b1s[UU], w2s[UU], b2s[UU])
    odd_out = d - _ref_branch(c, w1s[PP], b1s[PP], w2s[PP], b2s[PP])
    return even_out, odd_out


def make_params(key, in_planes, hidden_size=1):
    """Deterministic synthetic weights for the 4 branches (phi, psi, U, P)."""
    C = in_planes
    Ch = int(in_planes * hidden_size)
    k1, k2, k3, k4 = jax.random.split(key, 4)
    scale1 = 1.0 / jnp.sqrt(C * K1)
    scale2 = 1.0 / jnp.sqrt(Ch * K2)
    w1s = jax.random.uniform(k1, (4, K1, C, Ch), jnp.float32, -scale1, scale1)
    b1s = jax.random.uniform(k2, (4, 1, Ch), jnp.float32, -scale1, scale1)
    w2s = jax.random.uniform(k3, (4, K2, Ch, C), jnp.float32, -scale2, scale2)
    b2s = jax.random.uniform(k4, (4, 1, C), jnp.float32, -scale2, scale2)
    return w1s, b1s, w2s, b2s


if __name__ == "__main__":
    B, T, C = 2, 16, 4      # batch, seq length (per half), in_planes
    hidden_size = 1

    key = jax.random.PRNGKey(0)
    kx, ko, kp = jax.random.split(key, 3)
    x_even = jax.random.normal(kx, (B, T, C), jnp.float32)
    x_odd = jax.random.normal(ko, (B, T, C), jnp.float32)
    params = make_params(kp, C, hidden_size)

    ref_even, ref_odd = interactor_ref(x_even, x_odd, params)

    # Exact-math path (all-f32 matmuls): tight check of the fused-kernel math.
    even_f32, odd_f32 = jax.block_until_ready(
        interactor_pallas(x_even, x_odd, params, use_bf16=False))
    assert jnp.allclose(even_f32, ref_even, atol=1e-4, rtol=1e-4), "even (f32) mismatch"
    assert jnp.allclose(odd_f32, ref_odd, atol=1e-4, rtol=1e-4), "odd (f32) mismatch"

    # Default path (bf16 MXU operands for the U/P pair; gates + elementwise f32).
    even_out, odd_out = jax.block_until_ready(
        interactor_pallas(x_even, x_odd, params))
    assert jnp.allclose(even_out, ref_even, atol=5e-2, rtol=5e-2), "even mismatch"
    assert jnp.allclose(odd_out, ref_odd, atol=5e-2, rtol=5e-2), "odd mismatch"

    # Exercise the fused layer-to-layer entry point and the multi-step grid path.
    x_pair = jnp.concatenate([x_even, x_odd], axis=-1)
    fused = jax.block_until_ready(
        interactor_pallas_fused(x_pair, params, block_b=1))
    assert jnp.allclose(fused[..., :C], ref_even, atol=5e-2, rtol=5e-2), "fused even mismatch"
    assert jnp.allclose(fused[..., C:], ref_odd, atol=5e-2, rtol=5e-2), "fused odd mismatch"

    print("KERNEL_OK")
</pallas_src>

<mosaic_0001>
module attributes {stable_mosaic.version = 11 : i64} {
  func.func @_interactor_kernel(%arg0: i32, %arg1: memref<2x16x8xf32, #tpu.memory_space<vmem>>, %arg2: memref<40x8xf32, #tpu.memory_space<vmem>>, %arg3: memref<1x8xf32, #tpu.memory_space<vmem>>, %arg4: memref<24x8xf32, #tpu.memory_space<vmem>>, %arg5: memref<1x8xf32, #tpu.memory_space<vmem>>, %arg6: memref<40x8xf32, #tpu.memory_space<vmem>>, %arg7: memref<1x8xf32, #tpu.memory_space<vmem>>, %arg8: memref<24x8xf32, #tpu.memory_space<vmem>>, %arg9: memref<1x8xf32, #tpu.memory_space<vmem>>, %arg10: memref<2x128xf32, #tpu.memory_space<vmem>>) attributes {dimension_semantics = [#tpu.dimension_semantics<parallel>], iteration_bounds = array<i64: 1>, scalar_prefetch = 0 : i64, scratch_operands = 0 : i64, tpu.core_type = #tpu.core_type<tc>, window_params = [{transform_indices = @transform_0, window_bounds = array<i64: 2, 16, 8>}, {pipeline_mode = #tpu.pipeline_mode<synchronous>, transform_indices = @transform_1, window_bounds = array<i64: 40, 8>}, {pipeline_mode = #tpu.pipeline_mode<synchronous>, transform_indices = @transform_2, window_bounds = array<i64: 1, 8>}, {pipeline_mode = #tpu.pipeline_mode<synchronous>, transform_indices = @transform_3, window_bounds = array<i64: 24, 8>}, {pipeline_mode = #tpu.pipeline_mode<synchronous>, transform_indices = @transform_4, window_bounds = array<i64: 1, 8>}, {pipeline_mode = #tpu.pipeline_mode<synchronous>, transform_indices = @transform_5, window_bounds = array<i64: 40, 8>}, {pipeline_mode = #tpu.pipeline_mode<synchronous>, transform_indices = @transform_6, window_bounds = array<i64: 1, 8>}, {pipeline_mode = #tpu.pipeline_mode<synchronous>, transform_indices = @transform_7, window_bounds = array<i64: 24, 8>}, {pipeline_mode = #tpu.pipeline_mode<synchronous>, transform_indices = @transform_8, window_bounds = array<i64: 1, 8>}, {transform_indices = @transform_9, window_bounds = array<i64: 2, 128>}]} {
    %c0 = arith.constant 0 : index
    %c0_0 = arith.constant 0 : index
    %c0_1 = arith.constant 0 : index
    %0 = vector.load %arg1[%c0, %c0_0, %c0_1] : memref<2x16x8xf32, #tpu.memory_space<vmem>>, vector<1x16x8xf32>
    %1 = vector.shape_cast %0 : vector<1x16x8xf32> to vector<16x8xf32>
    %c1 = arith.constant 1 : index
    %c0_2 = arith.constant 0 : index
    %c0_3 = arith.constant 0 : index
    %2 = vector.load %arg1[%c1, %c0_2, %c0_3] : memref<2x16x8xf32, #tpu.memory_space<vmem>>, vector<1x16x8xf32>
    %3 = vector.shape_cast %2 : vector<1x16x8xf32> to vector<16x8xf32>
    %4 = tpu.concatenate %1, %3 in 0 : vector<16x8xf32>, vector<16x8xf32> -> vector<32x8xf32>
    %c0_4 = arith.constant 0 : index
    %c0_5 = arith.constant 0 : index
    %5 = vector.load %arg2[%c0_4, %c0_5] : memref<40x8xf32, #tpu.memory_space<vmem>>, vector<40x8xf32>
    %c0_6 = arith.constant 0 : index
    %c0_7 = arith.constant 0 : index
    %6 = vector.load %arg3[%c0_6, %c0_7] : memref<1x8xf32, #tpu.memory_space<vmem>>, vector<1x8xf32>
    %c0_8 = arith.constant 0 : index
    %c0_9 = arith.constant 0 : index
    %7 = vector.load %arg4[%c0_8, %c0_9] : memref<24x8xf32, #tpu.memory_space<vmem>>, vector<24x8xf32>
    %c0_10 = arith.constant 0 : index
    %c0_11 = arith.constant 0 : index
    %8 = vector.load %arg5[%c0_10, %c0_11] : memref<1x8xf32, #tpu.memory_space<vmem>>, vector<1x8xf32>
    %9 = vector.extract_strided_slice %4 {offsets = [0, 0], sizes = [16, 8], strides = [1, 1]} : vector<32x8xf32> to vector<16x8xf32>
    %10 = vector.extract_strided_slice %9 {offsets = [0, 0], sizes = [1, 8], strides = [1, 1]} : vector<16x8xf32> to vector<1x8xf32>
    %11 = vector.shape_cast %10 : vector<1x8xf32> to vector<1x8xf32>
    %12 = vector.broadcast %11 : vector<1x8xf32> to vector<3x8xf32>
    %13 = vector.extract_strided_slice %9 {offsets = [15, 0], sizes = [1, 8], strides = [1, 1]} : vector<16x8xf32> to vector<1x8xf32>
    %14 = vector.shape_cast %13 : vector<1x8xf32> to vector<1x8xf32>
    %15 = vector.broadcast %14 : vector<1x8xf32> to vector<3x8xf32>
    %16 = tpu.concatenate %12, %9, %15 in 0 : vector<3x8xf32>, vector<16x8xf32>, vector<3x8xf32> -> vector<22x8xf32>
    %17 = vector.extract_strided_slice %16 {offsets = [0, 0], sizes = [18, 8], strides = [1, 1]} : vector<22x8xf32> to vector<18x8xf32>
    %18 = vector.extract_strided_slice %16 {offsets = [1, 0], sizes = [18, 8], strides = [1, 1]} : vector<22x8xf32> to vector<18x8xf32>
    %19 = vector.extract_strided_slice %16 {offsets = [2, 0], sizes = [18, 8], strides = [1, 1]} : vector<22x8xf32> to vector<18x8xf32>
    %20 = vector.extract_strided_slice %16 {offsets = [3, 0], sizes = [18, 8], strides = [1, 1]} : vector<22x8xf32> to vector<18x8xf32>
    %21 = vector.extract_strided_slice %16 {offsets = [4, 0], sizes = [18, 8], strides = [1, 1]} : vector<22x8xf32> to vector<18x8xf32>
    %22 = tpu.concatenate %17, %18, %19, %20, %21 in 1 : vector<18x8xf32>, vector<18x8xf32>, vector<18x8xf32>, vector<18x8xf32>, vector<18x8xf32> -> vector<18x40xf32>
    %23 = vector.extract_strided_slice %4 {offsets = [16, 0], sizes = [16, 8], strides = [1, 1]} : vector<32x8xf32> to vector<16x8xf32>
    %24 = vector.extract_strided_slice %23 {offsets = [0, 0], sizes = [1, 8], strides = [1, 1]} : vector<16x8xf32> to vector<1x8xf32>
    %25 = vector.shape_cast %24 : vector<1x8xf32> to vector<1x8xf32>
    %26 = vector.broadcast %25 : vector<1x8xf32> to vector<3x8xf32>
    %27 = vector.extract_strided_slice %23 {offsets = [15, 0], sizes = [1, 8], strides = [1, 1]} : vector<16x8xf32> to vector<1x8xf32>
    %28 = vector.shape_cast %27 : vector<1x8xf32> to vector<1x8xf32>
    %29 = vector.broadcast %28 : vector<1x8xf32> to vector<3x8xf32>
    %30 = tpu.concatenate %26, %23, %29 in 0 : vector<3x8xf32>, vector<16x8xf32>, vector<3x8xf32> -> vector<22x8xf32>
    %31 = vector.extract_strided_slice %30 {offsets = [0, 0], sizes = [18, 8], strides = [1, 1]} : vector<22x8xf32> to vector<18x8xf32>
    %32 = vector.extract_strided_slice %30 {offsets = [1, 0], sizes = [18, 8], strides = [1, 1]} : vector<22x8xf32> to vector<18x8xf32>
    %33 = vector.extract_strided_slice %30 {offsets = [2, 0], sizes = [18, 8], strides = [1, 1]} : vector<22x8xf32> to vector<18x8xf32>
    %34 = vector.extract_strided_slice %30 {offsets = [3, 0], sizes = [18, 8], strides = [1, 1]} : vector<22x8xf32> to vector<18x8xf32>
    %35 = vector.extract_strided_slice %30 {offsets = [4, 0], sizes = [18, 8], strides = [1, 1]} : vector<22x8xf32> to vector<18x8xf32>
    %36 = tpu.concatenate %31, %32, %33, %34, %35 in 1 : vector<18x8xf32>, vector<18x8xf32>, vector<18x8xf32>, vector<18x8xf32>, vector<18x8xf32> -> vector<18x40xf32>
    %37 = tpu.concatenate %22, %36 in 0 : vector<18x40xf32>, vector<18x40xf32> -> vector<36x40xf32>
    %cst = arith.constant dense<0.000000e+00> : vector<36x8xf32>
    %38 = tpu.matmul %37, %5, %cst {dimension_numbers = #tpu.dot_dimension_numbers<[1], [0], [0], [1], [0, 0, 1, 1], [], []>} : vector<36x40xf32>, vector<40x8xf32>, vector<36x8xf32> -> vector<36x8xf32>
    %39 = vector.broadcast %6 : vector<1x8xf32> to vector<36x8xf32>
    %40 = arith.addf %38, %39 : vector<36x8xf32>
    %cst_12 = arith.constant 0.000000e+00 : f32
    %41 = vector.broadcast %cst_12 : f32 to vector<36x8xf32>
    %42 = arith.cmpf ogt, %40, %41 : vector<36x8xf32>
    %cst_13 = arith.constant 0.00999999977 : f32
    %43 = vector.broadcast %cst_13 : f32 to vector<36x8xf32>
    %44 = arith.mulf %43, %40 : vector<36x8xf32>
    %45 = arith.select %42, %40, %44 : vector<36x8xi1>, vector<36x8xf32>
    %46 = vector.extract_strided_slice %45 {offsets = [0, 0], sizes = [18, 8], strides = [1, 1]} : vector<36x8xf32> to vector<18x8xf32>
    %47 = vector.extract_strided_slice %46 {offsets = [0, 0], sizes = [16, 8], strides = [1, 1]} : vector<18x8xf32> to vector<16x8xf32>
    %48 = vector.extract_strided_slice %46 {offsets = [1, 0], sizes = [16, 8], strides = [1, 1]} : vector<18x8xf32> to vector<16x8xf32>
    %49 = vector.extract_strided_slice %46 {offsets = [2, 0], sizes = [16, 8], strides = [1, 1]} : vector<18x8xf32> to vector<16x8xf32>
    %50 = tpu.concatenate %47, %48, %49 in 1 : vector<16x8xf32>, vector<16x8xf32>, vector<16x8xf32> -> vector<16x24xf32>
    %51 = vector.extract_strided_slice %45 {offsets = [18, 0], sizes = [18, 8], strides = [1, 1]} : vector<36x8xf32> to vector<18x8xf32>
    %52 = vector.extract_strided_slice %51 {offsets = [0, 0], sizes = [16, 8], strides = [1, 1]} : vector<18x8xf32> to vector<16x8xf32>
    %53 = vector.extract_strided_slice %51 {offsets = [1, 0], sizes = [16, 8], strides = [1, 1]} : vector<18x8xf32> to vector<16x8xf32>
    %54 = vector.extract_strided_slice %51 {offsets = [2, 0], sizes = [16, 8], strides = [1, 1]} : vector<18x8xf32> to vector<16x8xf32>
    %55 = tpu.concatenate %52, %53, %54 in 1 : vector<16x8xf32>, vector<16x8xf32>, vector<16x8xf32> -> vector<16x24xf32>
    %56 = tpu.concatenate %50, %55 in 0 : vector<16x24xf32>, vector<16x24xf32> -> vector<32x24xf32>
    %cst_14 = arith.constant dense<0.000000e+00> : vector<32x8xf32>
    %57 = tpu.matmul %56, %7, %cst_14 {dimension_numbers = #tpu.dot_dimension_numbers<[1], [0], [0], [1], [0, 0, 1, 1], [], []>} : vector<32x24xf32>, vector<24x8xf32>, vector<32x8xf32> -> vector<32x8xf32>
    %58 = vector.broadcast %8 : vector<1x8xf32> to vector<32x8xf32>
    %59 = arith.addf %57, %58 : vector<32x8xf32>
    %60 = math.tanh %59 : vector<32x8xf32>
    %61 = math.exp %60 : vector<32x8xf32>
    %62 = arith.mulf %4, %61 : vector<32x8xf32>
    %c0_15 = arith.constant 0 : index
    %c0_16 = arith.constant 0 : index
    %63 = vector.load %arg6[%c0_15, %c0_16] : memref<40x8xf32, #tpu.memory_space<vmem>>, vector<40x8xf32>
    %c0_17 = arith.constant 0 : index
    %c0_18 = arith.constant 0 : index
    %64 = vector.load %arg7[%c0_17, %c0_18] : memref<1x8xf32, #tpu.memory_space<vmem>>, vector<1x8xf32>
    %c0_19 = arith.constant 0 : index
    %c0_20 = arith.constant 0 : index
    %65 = vector.load %arg8[%c0_19, %c0_20] : memref<24x8xf32, #tpu.memory_space<vmem>>, vector<24x8xf32>
    %c0_21 = arith.constant 0 : index
    %c0_22 = arith.constant 0 : index
    %66 = vector.load %arg9[%c0_21, %c0_22] : memref<1x8xf32, #tpu.memory_space<vmem>>, vector<1x8xf32>
    %67 = vector.extract_strided_slice %62 {offsets = [0, 0], sizes = [16, 8], strides = [1, 1]} : vector<32x8xf32> to vector<16x8xf32>
    %68 = vector.extract_strided_slice %67 {offsets = [0, 0], sizes = [1, 8], strides = [1, 1]} : vector<16x8xf32> to vector<1x8xf32>
    %69 = vector.shape_cast %68 : vector<1x8xf32> to vector<1x8xf32>
    %70 = vector.broadcast %69 : vector<1x8xf32> to vector<3x8xf32>
    %71 = vector.extract_strided_slice %67 {offsets = [15, 0], sizes = [1, 8], strides = [1, 1]} : vector<16x8xf32> to vector<1x8xf32>
    %72 = vector.shape_cast %71 : vector<1x8xf32> to vector<1x8xf32>
    %73 = vector.broadcast %72 : vector<1x8xf32> to vector<3x8xf32>
    %74 = tpu.concatenate %70, %67, %73 in 0 : vector<3x8xf32>, vector<16x8xf32>, vector<3x8xf32> -> vector<22x8xf32>
    %75 = vector.extract_strided_slice %74 {offsets = [0, 0], sizes = [18, 8], strides = [1, 1]} : vector<22x8xf32> to vector<18x8xf32>
    %76 = vector.extract_strided_slice %74 {offsets = [1, 0], sizes = [18, 8], strides = [1, 1]} : vector<22x8xf32> to vector<18x8xf32>
    %77 = vector.extract_strided_slice %74 {offsets = [2, 0], sizes = [18, 8], strides = [1, 1]} : vector<22x8xf32> to vector<18x8xf32>
    %78 = vector.extract_strided_slice %74 {offsets = [3, 0], sizes = [18, 8], strides = [1, 1]} : vector<22x8xf32> to vector<18x8xf32>
    %79 = vector.extract_strided_slice %74 {offsets = [4, 0], sizes = [18, 8], strides = [1, 1]} : vector<22x8xf32> to vector<18x8xf32>
    %80 = tpu.concatenate %75, %76, %77, %78, %79 in 1 : vector<18x8xf32>, vector<18x8xf32>, vector<18x8xf32>, vector<18x8xf32>, vector<18x8xf32> -> vector<18x40xf32>
    %81 = vector.extract_strided_slice %62 {offsets = [16, 0], sizes = [16, 8], strides = [1, 1]} : vector<32x8xf32> to vector<16x8xf32>
    %82 = vector.extract_strided_slice %81 {offsets = [0, 0], sizes = [1, 8], strides = [1, 1]} : vector<16x8xf32> to vector<1x8xf32>
    %83 = vector.shape_cast %82 : vector<1x8xf32> to vector<1x8xf32>
    %84 = vector.broadcast %83 : vector<1x8xf32> to vector<3x8xf32>
    %85 = vector.extract_strided_slice %81 {offsets = [15, 0], sizes = [1, 8], strides = [1, 1]} : vector<16x8xf32> to vector<1x8xf32>
    %86 = vector.shape_cast %85 : vector<1x8xf32> to vector<1x8xf32>
    %87 = vector.broadcast %86 : vector<1x8xf32> to vector<3x8xf32>
    %88 = tpu.concatenate %84, %81, %87 in 0 : vector<3x8xf32>, vector<16x8xf32>, vector<3x8xf32> -> vector<22x8xf32>
    %89 = vector.extract_strided_slice %88 {offsets = [0, 0], sizes = [18, 8], strides = [1, 1]} : vector<22x8xf32> to vector<18x8xf32>
    %90 = vector.extract_strided_slice %88 {offsets = [1, 0], sizes = [18, 8], strides = [1, 1]} : vector<22x8xf32> to vector<18x8xf32>
    %91 = vector.extract_strided_slice %88 {offsets = [2, 0], sizes = [18, 8], strides = [1, 1]} : vector<22x8xf32> to vector<18x8xf32>
    %92 = vector.extract_strided_slice %88 {offsets = [3, 0], sizes = [18, 8], strides = [1, 1]} : vector<22x8xf32> to vector<18x8xf32>
    %93 = vector.extract_strided_slice %88 {offsets = [4, 0], sizes = [18, 8], strides = [1, 1]} : vector<22x8xf32> to vector<18x8xf32>
    %94 = tpu.concatenate %89, %90, %91, %92, %93 in 1 : vector<18x8xf32>, vector<18x8xf32>, vector<18x8xf32>, vector<18x8xf32>, vector<18x8xf32> -> vector<18x40xf32>
    %95 = tpu.concatenate %80, %94 in 0 : vector<18x40xf32>, vector<18x40xf32> -> vector<36x40xf32>
    %cst_23 = arith.constant dense<0.000000e+00> : vector<36x8xf32>
    %96 = tpu.matmul %95, %63, %cst_23 {dimension_numbers = #tpu.dot_dimension_numbers<[1], [0], [0], [1], [0, 0, 1, 1], [], []>} : vector<36x40xf32>, vector<40x8xf32>, vector<36x8xf32> -> vector<36x8xf32>
    %97 = vector.broadcast %64 : vector<1x8xf32> to vector<36x8xf32>
    %98 = arith.addf %96, %97 : vector<36x8xf32>
    %cst_24 = arith.constant 0.000000e+00 : f32
    %99 = vector.broadcast %cst_24 : f32 to vector<36x8xf32>
    %100 = arith.cmpf ogt, %98, %99 : vector<36x8xf32>
    %cst_25 = arith.constant 0.00999999977 : f32
    %101 = vector.broadcast %cst_25 : f32 to vector<36x8xf32>
    %102 = arith.mulf %101, %98 : vector<36x8xf32>
    %103 = arith.select %100, %98, %102 : vector<36x8xi1>, vector<36x8xf32>
    %104 = vector.extract_strided_slice %103 {offsets = [0, 0], sizes = [18, 8], strides = [1, 1]} : vector<36x8xf32> to vector<18x8xf32>
    %105 = vector.extract_strided_slice %104 {offsets = [0, 0], sizes = [16, 8], strides = [1, 1]} : vector<18x8xf32> to vector<16x8xf32>
    %106 = vector.extract_strided_slice %104 {offsets = [1, 0], sizes = [16, 8], strides = [1, 1]} : vector<18x8xf32> to vector<16x8xf32>
    %107 = vector.extract_strided_slice %104 {offsets = [2, 0], sizes = [16, 8], strides = [1, 1]} : vector<18x8xf32> to vector<16x8xf32>
    %108 = tpu.concatenate %105, %106, %107 in 1 : vector<16x8xf32>, vector<16x8xf32>, vector<16x8xf32> -> vector<16x24xf32>
    %109 = vector.extract_strided_slice %103 {offsets = [18, 0], sizes = [18, 8], strides = [1, 1]} : vector<36x8xf32> to vector<18x8xf32>
    %110 = vector.extract_strided_slice %109 {offsets = [0, 0], sizes = [16, 8], strides = [1, 1]} : vector<18x8xf32> to vector<16x8xf32>
    %111 = vector.extract_strided_slice %109 {offsets = [1, 0], sizes = [16, 8], strides = [1, 1]} : vector<18x8xf32> to vector<16x8xf32>
    %112 = vector.extract_strided_slice %109 {offsets = [2, 0], sizes = [16, 8], strides = [1, 1]} : vector<18x8xf32> to vector<16x8xf32>
    %113 = tpu.concatenate %110, %111, %112 in 1 : vector<16x8xf32>, vector<16x8xf32>, vector<16x8xf32> -> vector<16x24xf32>
    %114 = tpu.concatenate %108, %113 in 0 : vector<16x24xf32>, vector<16x24xf32> -> vector<32x24xf32>
    %cst_26 = arith.constant dense<0.000000e+00> : vector<32x8xf32>
    %115 = tpu.matmul %114, %65, %cst_26 {dimension_numbers = #tpu.dot_dimension_numbers<[1], [0], [0], [1], [0, 0, 1, 1], [], []>} : vector<32x24xf32>, vector<24x8xf32>, vector<32x8xf32> -> vector<32x8xf32>
    %116 = vector.broadcast %66 : vector<1x8xf32> to vector<32x8xf32>
    %117 = arith.addf %115, %116 : vector<32x8xf32>
    %118 = math.tanh %117 : vector<32x8xf32>
    %119 = arith.addf %62, %118 : vector<32x8xf32>
    %120 = vector.extract_strided_slice %119 {offsets = [0, 0], sizes = [16, 8], strides = [1, 1]} : vector<32x8xf32> to vector<16x8xf32>
    %121 = vector.extract_strided_slice %120 {offsets = [0, 0], sizes = [1, 8], strides = [1, 1]} : vector<16x8xf32> to vector<1x8xf32>
    %122 = vector.extract_strided_slice %120 {offsets = [1, 0], sizes = [1, 8], strides = [1, 1]} : vector<16x8xf32> to vector<1x8xf32>
    %123 = vector.extract_strided_slice %120 {offsets = [2, 0], sizes = [1, 8], strides = [1, 1]} : vector<16x8xf32> to vector<1x8xf32>
    %124 = vector.extract_strided_slice %120 {offsets = [3, 0], sizes = [1, 8], strides = [1, 1]} : vector<16x8xf32> to vector<1x8xf32>
    %125 = vector.extract_strided_slice %120 {offsets = [4, 0], sizes = [1, 8], strides = [1, 1]} : vector<16x8xf32> to vector<1x8xf32>
    %126 = vector.extract_strided_slice %120 {offsets = [5, 0], sizes = [1, 8], strides = [1, 1]} : vector<16x8xf32> to vector<1x8xf32>
    %127 = vector.extract_strided_slice %120 {offsets = [6, 0], sizes = [1, 8], strides = [1, 1]} : vector<16x8xf32> to vector<1x8xf32>
    %128 = vector.extract_strided_slice %120 {offsets = [7, 0], sizes = [1, 8], strides = [1, 1]} : vector<16x8xf32> to vector<1x8xf32>
    %129 = vector.extract_strided_slice %120 {offsets = [8, 0], sizes = [1, 8], strides = [1, 1]} : vector<16x8xf32> to vector<1x8xf32>
    %130 = vector.extract_strided_slice %120 {offsets = [9, 0], sizes = [1, 8], strides = [1, 1]} : vector<16x8xf32> to vector<1x8xf32>
    %131 = vector.extract_strided_slice %120 {offsets = [10, 0], sizes = [1, 8], strides = [1, 1]} : vector<16x8xf32> to vector<1x8xf32>
    %132 = vector.extract_strided_slice %120 {offsets = [11, 0], sizes = [1, 8], strides = [1, 1]} : vector<16x8xf32> to vector<1x8xf32>
    %133 = vector.extract_strided_slice %120 {offsets = [12, 0], sizes = [1, 8], strides = [1, 1]} : vector<16x8xf32> to vector<1x8xf32>
    %134 = vector.extract_strided_slice %120 {offsets = [13, 0], sizes = [1, 8], strides = [1, 1]} : vector<16x8xf32> to vector<1x8xf32>
    %135 = vector.extract_strided_slice %120 {offsets = [14, 0], sizes = [1, 8], strides = [1, 1]} : vector<16x8xf32> to vector<1x8xf32>
    %136 = vector.extract_strided_slice %120 {offsets = [15, 0], sizes = [1, 8], strides = [1, 1]} : vector<16x8xf32> to vector<1x8xf32>
    %137 = tpu.concatenate %121, %122, %123, %124, %125, %126, %127, %128, %129, %130, %131, %132, %133, %134, %135, %136 in 1 : vector<1x8xf32>, vector<1x8xf32>, vector<1x8xf32>, vector<1x8xf32>, vector<1x8xf32>, vector<1x8xf32>, vector<1x8xf32>, vector<1x8xf32>, vector<1x8xf32>, vector<1x8xf32>, vector<1x8xf32>, vector<1x8xf32>, vector<1x8xf32>, vector<1x8xf32>, vector<1x8xf32>, vector<1x8xf32> -> vector<1x128xf32>
    %138 = vector.extract_strided_slice %119 {offsets = [16, 0], sizes = [16, 8], strides = [1, 1]} : vector<32x8xf32> to vector<16x8xf32>
    %139 = vector.extract_strided_slice %138 {offsets = [0, 0], sizes = [1, 8], strides = [1, 1]} : vector<16x8xf32> to vector<1x8xf32>
    %140 = vector.extract_strided_slice %138 {offsets = [1, 0], sizes = [1, 8], strides = [1, 1]} : vector<16x8xf32> to vector<1x8xf32>
    %141 = vector.extract_strided_slice %138 {offsets = [2, 0], sizes = [1, 8], strides = [1, 1]} : vector<16x8xf32> to vector<1x8xf32>
    %142 = vector.extract_strided_slice %138 {offsets = [3, 0], sizes = [1, 8], strides = [1, 1]} : vector<16x8xf32> to vector<1x8xf32>
    %143 = vector.extract_strided_slice %138 {offsets = [4, 0], sizes = [1, 8], strides = [1, 1]} : vector<16x8xf32> to vector<1x8xf32>
    %144 = vector.extract_strided_slice %138 {offsets = [5, 0], sizes = [1, 8], strides = [1, 1]} : vector<16x8xf32> to vector<1x8xf32>
    %145 = vector.extract_strided_slice %138 {offsets = [6, 0], sizes = [1, 8], strides = [1, 1]} : vector<16x8xf32> to vector<1x8xf32>
    %146 = vector.extract_strided_slice %138 {offsets = [7, 0], sizes = [1, 8], strides = [1, 1]} : vector<16x8xf32> to vector<1x8xf32>
    %147 = vector.extract_strided_slice %138 {offsets = [8, 0], sizes = [1, 8], strides = [1, 1]} : vector<16x8xf32> to vector<1x8xf32>
    %148 = vector.extract_strided_slice %138 {offsets = [9, 0], sizes = [1, 8], strides = [1, 1]} : vector<16x8xf32> to vector<1x8xf32>
    %149 = vector.extract_strided_slice %138 {offsets = [10, 0], sizes = [1, 8], strides = [1, 1]} : vector<16x8xf32> to vector<1x8xf32>
    %150 = vector.extract_strided_slice %138 {offsets = [11, 0], sizes = [1, 8], strides = [1, 1]} : vector<16x8xf32> to vector<1x8xf32>
    %151 = vector.extract_strided_slice %138 {offsets = [12, 0], sizes = [1, 8], strides = [1, 1]} : vector<16x8xf32> to vector<1x8xf32>
    %152 = vector.extract_strided_slice %138 {offsets = [13, 0], sizes = [1, 8], strides = [1, 1]} : vector<16x8xf32> to vector<1x8xf32>
    %153 = vector.extract_strided_slice %138 {offsets = [14, 0], sizes = [1, 8], strides = [1, 1]} : vector<16x8xf32> to vector<1x8xf32>
    %154 = vector.extract_strided_slice %138 {offsets = [15, 0], sizes = [1, 8], strides = [1, 1]} : vector<16x8xf32> to vector<1x8xf32>
    %155 = tpu.concatenate %139, %140, %141, %142, %143, %144, %145, %146, %147, %148, %149, %150, %151, %152, %153, %154 in 1 : vector<1x8xf32>, vector<1x8xf32>, vector<1x8xf32>, vector<1x8xf32>, vector<1x8xf32>, vector<1x8xf32>, vector<1x8xf32>, vector<1x8xf32>, vector<1x8xf32>, vector<1x8xf32>, vector<1x8xf32>, vector<1x8xf32>, vector<1x8xf32>, vector<1x8xf32>, vector<1x8xf32>, vector<1x8xf32> -> vector<1x128xf32>
    %156 = tpu.concatenate %137, %155 in 0 : vector<1x128xf32>, vector<1x128xf32> -> vector<2x128xf32>
    %c0_27 = arith.constant 0 : index
    %c0_28 = arith.constant 0 : index
    %157 = vector.load %arg10[%c0_27, %c0_28] : memref<2x128xf32, #tpu.memory_space<vmem>>, vector<2x128xf32>
    tpu.vector_store %arg10[%c0_27, %c0_28], %156 {strides = array<i32>} : memref<2x128xf32, #tpu.memory_space<vmem>>, vector<2x128xf32>,
    return
  }
  func.func @transform_0(%arg0: i32) -> (i32, i32, i32) {
    %c0_i32 = arith.constant 0 : i32
    %c0_i32_0 = arith.constant 0 : i32
    %c0_i32_1 = arith.constant 0 : i32
    return %arg0, %c0_i32, %c0_i32_0 : i32, i32, i32
  }
  func.func @transform_1(%arg0: i32) -> (i32, i32) {
    %c0_i32 = arith.constant 0 : i32
    %c0_i32_0 = arith.constant 0 : i32
    %c0_i32_1 = arith.constant 0 : i32
    return %c0_i32, %c0_i32_0 : i32, i32
  }
  func.func @transform_2(%arg0: i32) -> (i32, i32) {
    %c0_i32 = arith.constant 0 : i32
    %c0_i32_0 = arith.constant 0 : i32
    %c0_i32_1 = arith.constant 0 : i32
    return %c0_i32, %c0_i32_0 : i32, i32
  }
  func.func @transform_3(%arg0: i32) -> (i32, i32) {
    %c0_i32 = arith.constant 0 : i32
    %c0_i32_0 = arith.constant 0 : i32
    %c0_i32_1 = arith.constant 0 : i32
    return %c0_i32, %c0_i32_0 : i32, i32
  }
  func.func @transform_4(%arg0: i32) -> (i32, i32) {
    %c0_i32 = arith.constant 0 : i32
    %c0_i32_0 = arith.constant 0 : i32
    %c0_i32_1 = arith.constant 0 : i32
    return %c0_i32, %c0_i32_0 : i32, i32
  }
  func.func @transform_5(%arg0: i32) -> (i32, i32) {
    %c0_i32 = arith.constant 0 : i32
    %c0_i32_0 = arith.constant 0 : i32
    %c0_i32_1 = arith.constant 0 : i32
    return %c0_i32, %c0_i32_0 : i32, i32
  }
  func.func @transform_6(%arg0: i32) -> (i32, i32) {
    %c0_i32 = arith.constant 0 : i32
    %c0_i32_0 = arith.constant 0 : i32
    %c0_i32_1 = arith.constant 0 : i32
    return %c0_i32, %c0_i32_0 : i32, i32
  }
  func.func @transform_7(%arg0: i32) -> (i32, i32) {
    %c0_i32 = arith.constant 0 : i32
    %c0_i32_0 = arith.constant 0 : i32
    %c0_i32_1 = arith.constant 0 : i32
    return %c0_i32, %c0_i32_0 : i32, i32
  }
  func.func @transform_8(%arg0: i32) -> (i32, i32) {
    %c0_i32 = arith.constant 0 : i32
    %c0_i32_0 = arith.constant 0 : i32
    %c0_i32_1 = arith.constant 0 : i32
    return %c0_i32, %c0_i32_0 : i32, i32
  }
  func.func @transform_9(%arg0: i32) -> (i32, i32) {
    %c0_i32 = arith.constant 0 : i32
    %c0_i32_0 = arith.constant 0 : i32
    return %arg0, %c0_i32 : i32, i32
  }
}

</mosaic_0001>

<llo_original>
// kernel: tpu_custom_call.1
$region0: #{tpu_custom_call.1}
  #allocation0 [shape = 'u32[]', space=smem, size = 0x4, offset = 0x4, fixed_abs, tag = 'smem constant byte address 0x4 - core index']
  #allocation1 [shape = 'u32[144,128]{1,0:T(1,128)}', space=vmem, size = 0x12000, scoped, tag = 'internal scratch']
  %s0 = inlined_call_operand.vmem [shape: f32[2,16,8], index: 0, kind: input, shape index: {}]
  %s1 = inlined_call_operand.vmem [shape: f32[40,8], index: 1, kind: input, shape index: {}]
  %s2 = inlined_call_operand.vmem [shape: f32[1,8], index: 2, kind: input, shape index: {}]
  %s3 = inlined_call_operand.vmem [shape: f32[24,8], index: 3, kind: input, shape index: {}]
  %s4 = inlined_call_operand.vmem [shape: f32[1,8], index: 4, kind: input, shape index: {}]
  %s5 = inlined_call_operand.vmem [shape: f32[40,8], index: 5, kind: input, shape index: {}]
  %s6 = inlined_call_operand.vmem [shape: f32[1,8], index: 6, kind: input, shape index: {}]
  %s7 = inlined_call_operand.vmem [shape: f32[24,8], index: 7, kind: input, shape index: {}]
  %s8 = inlined_call_operand.vmem [shape: f32[1,8], index: 8, kind: input, shape index: {}]
  %s9 = inlined_call_operand.hbm [shape: f32[2,128], index: 9, kind: output, shape index: {}]
  %s10 = sld [smem:[#allocation0]]
  $region46: #{tpu_custom_call.1} parent=0
    _
  %s12 = ssub.s32 1, %s10
  %s13 = scalar_select 0, %s12, %s10
  $region1: #{tpu_custom_call.1} parent=0
    #allocation2 [shape = 'u8[1024]{0}', space=vmem, size = 0x400, scoped, tag = 'output window, operand 0, single buffered']
    #allocation3 [shape = 's32[1]{0}', space=sflag, size = 0x4, scoped, tag = 'scoped memory for tpu_custom_call.1']
    %14 = vsyncpa [#allocation3], 0
    // Predicated region
    $region2: #{tpu_custom_call.1} parent=1 // pred_check
      _
    $region3: #{tpu_custom_call.1} parent=1 // pred_check_branch
      %16 = sbr.rel (0) target = $region5
    $region4: #{tpu_custom_call.1} parent=1 // pred_region
      _
    $region5: #{tpu_custom_call.1} parent=1 // pred_fallthru
      _
    // Predicated region
    $region6: #{tpu_custom_call.1} parent=1 // pred_check
      _
    $region7: #{tpu_custom_call.1} parent=1 // pred_check_branch
      %18 = sbr.rel (0) target = $region9
    $region8: #{tpu_custom_call.1} parent=1 // pred_region
      _
    $region9: #{tpu_custom_call.1} parent=1 // pred_fallthru
      _
    // Predicated region
    $region10: #{tpu_custom_call.1} parent=1 // pred_check
      _
    $region11: #{tpu_custom_call.1} parent=1 // pred_check_branch
      %20 = sbr.rel (0) target = $region13
    $region12: #{tpu_custom_call.1} parent=1 // pred_region
      _
    $region13: #{tpu_custom_call.1} parent=1 // pred_fallthru
      _
    // Predicated region
    $region14: #{tpu_custom_call.1} parent=1 // pred_check
      _
    $region15: #{tpu_custom_call.1} parent=1 // pred_check_branch
      %22 = sbr.rel (0) target = $region17
    $region16: #{tpu_custom_call.1} parent=1 // pred_region
      _
    $region17: #{tpu_custom_call.1} parent=1 // pred_fallthru
      _
    // Predicated region
    $region18: #{tpu_custom_call.1} parent=1 // pred_check
      _
    $region19: #{tpu_custom_call.1} parent=1 // pred_check_branch
      %24 = sbr.rel (0) target = $region21
    $region20: #{tpu_custom_call.1} parent=1 // pred_region
      _
    $region21: #{tpu_custom_call.1} parent=1 // pred_fallthru
      _
    // Predicated region
    $region22: #{tpu_custom_call.1} parent=1 // pred_check
      _
    $region23: #{tpu_custom_call.1} parent=1 // pred_check_branch
      %26 = sbr.rel (0) target = $region25
    $region24: #{tpu_custom_call.1} parent=1 // pred_region
      _
    $region25: #{tpu_custom_call.1} parent=1 // pred_fallthru
      _
    // Predicated region
    $region26: #{tpu_custom_call.1} parent=1 // pred_check
      _
    $region27: #{tpu_custom_call.1} parent=1 // pred_check_branch
      %28 = sbr.rel (0) target = $region29
    $region28: #{tpu_custom_call.1} parent=1 // pred_region
      _
    $region29: #{tpu_custom_call.1} parent=1 // pred_fallthru
      _
    // Predicated region
    $region30: #{tpu_custom_call.1} parent=1 // pred_check
      _
    $region31: #{tpu_custom_call.1} parent=1 // pred_check_branch
      %30 = sbr.rel (0) target = $region33
    $region32: #{tpu_custom_call.1} parent=1 // pred_region
      _
    $region33: #{tpu_custom_call.1} parent=1 // pred_fallthru
      _
    // Predicated region
    $region34: #{tpu_custom_call.1} parent=1 // pred_check
      _
    $region35: #{tpu_custom_call.1} parent=1 // pred_check_branch
      %32 = sbr.rel (0) target = $region37
    $region36: #{tpu_custom_call.1} parent=1 // pred_region
      _
    $region37: #{tpu_custom_call.1} parent=1 // pred_fallthru
      _
    %v33 = vld [vmem:[%s0] sm:$0xff]
    %v34 = vld [vmem:[%s0 + $0x8] sm:$0xff]
    %s35 = scalar_lea.vmem %s0, 16
    %v36 = vld [vmem:[%s35] sm:$0xff]
    %v37 = vld [vmem:[%s35 + $0x8] sm:$0xff]
    %v38 = vld [vmem:[%s1] sm:$0xff]
    %v39 = vld [vmem:[%s1 + $0x8] sm:$0xff]
    %v40 = vld [vmem:[%s1 + $0x10] sm:$0xff]
    %v41 = vld [vmem:[%s1 + $0x18] sm:$0xff]
    %v42 = vld [vmem:[%s1 + $0x20] sm:$0xff]
    %v43 = vld [vmem:[%s2] sm:$0x1]
    %v44 = vld [vmem:[%s3] sm:$0xff]
    %v45 = vld [vmem:[%s3 + $0x8] sm:$0xff]
    %v46 = vld [vmem:[%s3 + $0x10] sm:$0xff]
    %v47 = vld [vmem:[%s4] sm:$0x1]
    %v48 = vlaneseq
    %v49 = vshrl.u32 %v48, 7
    %v50 = vsub.s32 0, %v49
    %v51 = vrot.slane %v33, %v50
    %v52 = vlaneseq
    %v53 = vshrl.u32 %v52, 7
    %v54 = vsub.s32 7, %v53
    %v55 = vrot.slane %v34, %v54
    %vm58 = vcmask 1042432
    %v59 = vrot.slane %v33, 5
    %v60 = vrot.slane %v34, 5
    %v61 = vsel %vm58, %v59, %v60
    %v65 = vsel %vm58, %v51, %v59
    %v66 = vsel %vm58, %v60, %v55
    %vm69 = vcmask 1046528
    %v70 = vrot.slane %v65, 1
    %v71 = vrot.slane %v61, 1
    %v72 = vsel %vm69, %v70, %v71
    %v73 = vrot.slane %v66, 1
    %v74 = vsel %vm69, %v71, %v73
    %75 = vrot.lane.b32.xlu0 %v72, 8
    %v76 = vpop.permute.xlu0 %75
    %77 = vrot.lane.b32.xlu0 %v74, 8
    %v78 = vpop.permute.xlu0 %77
    %79 = vrot.lane.b32.xlu0 %v73, 8
    %v80 = vpop.permute.xlu0 %79
    %vm84 = vcmask 1045504
    %v85 = vrot.slane %v65, 2
    %v86 = vrot.slane %v61, 2
    %v87 = vsel %vm84, %v85, %v86
    %v88 = vrot.slane %v66, 2
    %v89 = vsel %vm84, %v86, %v88
    %90 = vrot.lane.b32.xlu0 %v87, 16
    %v91 = vpop.permute.xlu0 %90
    %92 = vrot.lane.b32.xlu0 %v89, 16
    %v93 = vpop.permute.xlu0 %92
    %94 = vrot.lane.b32.xlu0 %v88, 16
    %v95 = vpop.permute.xlu0 %94
    %vm99 = vcmask 1044480
    %v100 = vrot.slane %v65, 3
    %v101 = vrot.slane %v61, 3
    %v102 = vsel %vm99, %v100, %v101
    %v103 = vrot.slane %v66, 3
    %v104 = vsel %vm99, %v101, %v103
    %105 = vrot.lane.b32.xlu0 %v102, 24
    %v106 = vpop.permute.xlu0 %105
    %107 = vrot.lane.b32.xlu0 %v104, 24
    %v108 = vpop.permute.xlu0 %107
    %109 = vrot.lane.b32.xlu0 %v103, 24
    %v110 = vpop.permute.xlu0 %109
    %vm114 = vcmask 1043456
    %v115 = vrot.slane %v65, 4
    %v116 = vrot.slane %v61, 4
    %v117 = vsel %vm114, %v115, %v116
    %v118 = vrot.slane %v66, 4
    %v119 = vsel %vm114, %v116, %v118
    %120 = vrot.lane.b32.xlu0 %v117, 32
    %v121 = vpop.permute.xlu0 %120
    %122 = vrot.lane.b32.xlu0 %v119, 32
    %v123 = vpop.permute.xlu0 %122
    %124 = vrot.lane.b32.xlu0 %v118, 32
    %v125 = vpop.permute.xlu0 %124
    %vm129 = vcmask 64512
    %v130 = vsel %vm129, %v65, %v76
    %v131 = vsel %vm129, %v61, %v78
    %v132 = vsel %vm129, %v66, %v80
    %vm133 = vcmask 130048
    %v134 = vsel %vm133, %v130, %v91
    %v135 = vsel %vm133, %v131, %v93
    %v136 = vsel %vm133, %v132, %v95
    %vm137 = vcmask 195584
    %v138 = vsel %vm137, %v134, %v106
    %v139 = vsel %vm137, %v135, %v108
    %v140 = vsel %vm137, %v136, %v110
    %vm141 = vcmask 261120
    %v142 = vsel %vm141, %v138, %v121
    %v143 = vsel %vm141, %v139, %v123
    %v144 = vsel %vm141, %v140, %v125
    %v145 = vlaneseq
    %v146 = vshrl.u32 %v145, 7
    %v147 = vsub.s32 0, %v146
    %v148 = vrot.slane %v36, %v147
    %v149 = vlaneseq
    %v150 = vshrl.u32 %v149, 7
    %v151 = vsub.s32 7, %v150
    %v152 = vrot.slane %v37, %v151
    %v155 = vrot.slane %v36, 5
    %v156 = vrot.slane %v37, 5
    %v157 = vsel %vm58, %v155, %v156
    %v161 = vsel %vm58, %v148, %v155
    %v162 = vsel %vm58, %v156, %v152
    %v165 = vrot.slane %v161, 1
    %v166 = vrot.slane %v157, 1
    %v167 = vsel %vm69, %v165, %v166
    %v168 = vrot.slane %v162, 1
    %v169 = vsel %vm69, %v166, %v168
    %170 = vrot.lane.b32.xlu0 %v167, 8
    %v171 = vpop.permute.xlu0 %170
    %172 = vrot.lane.b32.xlu0 %v169, 8
    %v173 = vpop.permute.xlu0 %172
    %174 = vrot.lane.b32.xlu0 %v168, 8
    %v175 = vpop.permute.xlu0 %174
    %v179 = vrot.slane %v161, 2
    %v180 = vrot.slane %v157, 2
    %v181 = vsel %vm84, %v179, %v180
    %v182 = vrot.slane %v162, 2
    %v183 = vsel %vm84, %v180, %v182
    %184 = vrot.lane.b32.xlu0 %v181, 16
    %v185 = vpop.permute.xlu0 %184
    %186 = vrot.lane.b32.xlu0 %v183, 16
    %v187 = vpop.permute.xlu0 %186
    %188 = vrot.lane.b32.xlu0 %v182, 16
    %v189 = vpop.permute.xlu0 %188
    %v193 = vrot.slane %v161, 3
    %v194 = vrot.slane %v157, 3
    %v195 = vsel %vm99, %v193, %v194
    %v196 = vrot.slane %v162, 3
    %v197 = vsel %vm99, %v194, %v196
    %198 = vrot.lane.b32.xlu0 %v195, 24
    %v199 = vpop.permute.xlu0 %198
    %200 = vrot.lane.b32.xlu0 %v197, 24
    %v201 = vpop.permute.xlu0 %200
    %202 = vrot.lane.b32.xlu0 %v196, 24
    %v203 = vpop.permute.xlu0 %202
    %v207 = vrot.slane %v161, 4
    %v208 = vrot.slane %v157, 4
    %v209 = vsel %vm114, %v207, %v208
    %v210 = vrot.slane %v162, 4
    %v211 = vsel %vm114, %v208, %v210
    %212 = vrot.lane.b32.xlu0 %v209, 32
    %v213 = vpop.permute.xlu0 %212
    %214 = vrot.lane.b32.xlu0 %v211, 32
    %v215 = vpop.permute.xlu0 %214
    %216 = vrot.lane.b32.xlu0 %v210, 32
    %v217 = vpop.permute.xlu0 %216
    %v221 = vsel %vm129, %v161, %v171
    %v222 = vsel %vm129, %v157, %v173
    %v223 = vsel %vm129, %v162, %v175
    %v224 = vsel %vm133, %v221, %v185
    %v225 = vsel %vm133, %v222, %v187
    %v226 = vsel %vm133, %v223, %v189
    %v227 = vsel %vm137, %v224, %v199
    %v228 = vsel %vm137, %v225, %v201
    %v229 = vsel %vm137, %v226, %v203
    %v230 = vsel %vm141, %v227, %v213
    %v231 = vsel %vm141, %v228, %v215
    %v232 = vsel %vm141, %v229, %v217
    %vm236 = vcmask 1041408
    %v237 = vrot.slane %v230, 6
    %v238 = vrot.slane %v231, 6
    %v239 = vsel %vm236, %v237, %v238
    %v240 = vrot.slane %v232, 6
    %v241 = vsel %vm236, %v238, %v240
    %v243 = vsel %vm236, %v144, %v237
    %v245 = vlaneseq
    %v246 = vshrl.u32 %v245, 7
    %v247 = vsub.s32 0, %v246
    %v248 = vrot.slane %v43, %v247
    %vm250 = vcmask 326656
    %v252 = vsel %vm250, %v142, 0
    %v255 = vsel %vm250, %v143, 0
    %v258 = vsel %vm250, %v243, 0
    %v260 = vsel %vm250, %v239, 0
    %v262 = vsel %vm250, %v241, 0
    %264 = vmatprep.subr.mxu0 0.0
    %265 = vmatpush1.msra.mxu0 %v38
    %266 = vmatprep.subr.mxu0 0.0
    %267 = vmatpush1.msra.mxu0 %v39
    %268 = vmatprep.subr.mxu0 0.0
    %269 = vmatpush1.msra.mxu0 %v40
    %270 = vmatprep.subr.mxu0 0.0
    %271 = vmatpush1.msra.mxu0 %v41
    %272 = vmatprep.subr.mxu0 0.0
    %273 = vmatpush1.msra.mxu0 %v42
    %274 = vmatprep.subr.mxu0 0.0
    %275 = vmatpush1.msra.mxu0 0.0
    %276 = vmatprep.subr.mxu0 0.0
    %277 = vmatpush1.msra.mxu0 0.0
    %278 = vmatprep.subr.mxu0 0.0
    %279 = vmatpush1.msra.mxu0 0.0
    %280 = vmatprep.subr.mxu0 0.0
    %281 = vmatpush1.msra.mxu0 0.0
    %282 = vmatprep.subr.mxu0 0.0
    %283 = vmatpush1.msra.mxu0 0.0
    %284 = vmatprep.subr.mxu0 0.0
    %285 = vmatpush1.msra.mxu0 0.0
    %286 = vmatprep.subr.mxu0 0.0
    %287 = vmatpush1.msra.mxu0 0.0
    %288 = vmatprep.subr.mxu0 0.0
    %289 = vmatpush1.msra.mxu0 0.0
    %290 = vmatprep.subr.mxu0 0.0
    %291 = vmatpush1.msra.mxu0 0.0
    %292 = vmatprep.subr.mxu0 0.0
    %293 = vmatpush1.msra.mxu0 0.0
    %294 = vmatprep.subr.mxu0 0.0
    %295 = vmatpush1.msra.mxu0 0.0
    %296 = vmatprep.subr.mxu0 0.0
    %297 = vmatpush1.msra.mxu0 0.0
    %298 = vmatprep.subr.mxu0 0.0
    %299 = vmatpush1.msra.mxu0 0.0
    %300 = vmatprep.subr.mxu0 0.0
    %301 = vmatpush1.msra.mxu0 0.0
    %302 = vmatprep.subr.mxu0 0.0
    %303 = vmatpush1.msra.mxu0 0.0
    %304 = vmatprep.subr.mxu0 0.0
    %305 = vmatpush1.msra.mxu0 0.0
    %306 = vmatprep.subr.mxu0 0.0
    %307 = vmatpush1.msra.mxu0 0.0
    %308 = vmatprep.subr.mxu0 0.0
    %309 = vmatpush1.msra.mxu0 0.0
    %310 = vmatprep.subr.mxu0 0.0
    %311 = vmatpush1.msra.mxu0 0.0
    %312 = vmatprep.subr.mxu0 0.0
    %313 = vmatpush1.msra.mxu0 0.0
    %314 = vmatprep.subr.mxu0 0.0
    %315 = vmatpush1.msra.mxu0 0.0
    %316 = vmatprep.subr.mxu0 0.0
    %317 = vmatpush1.msra.mxu0 0.0
    %318 = vmatprep.subr.mxu0 0.0
    %319 = vmatpush1.msra.mxu0 0.0
    %320 = vmatprep.subr.mxu0 0.0
    %321 = vmatpush1.msra.mxu0 0.0
    %322 = vmatprep.subr.mxu0 0.0
    %323 = vmatpush1.msra.mxu0 0.0
    %324 = vmatprep.subr.mxu0 0.0
    %325 = vmatpush1.msra.mxu0 0.0
    %326 = vmatprep.subr.mxu0 0.0
    %327 = vmatpush1.msra.mxu0 0.0
    %328 = vmatprep.mubr.f32.mxu0 0.0
    %329 = vmatmul.mubr.f32.gmra.mrb[0].mxu0 %v252
    %v330 = vpop.f32.mrb[0].mxu0
    %v331 = vadd.f32 %v248, %v330
    %v332 = vpop.f32.mrb[0].mxu0
    %333 = vmatprep.mubr.f32.mxu0 0.0
    %334 = vmatmul.mubr.f32.gmra.mrb[0].mxu0 %v255
    %v335 = vpop.f32.mrb[0].mxu0
    %v336 = vadd.f32 %v248, %v335
    %v337 = vpop.f32.mrb[0].mxu0
    %338 = vmatprep.mubr.f32.mxu0 0.0
    %339 = vmatmul.mubr.f32.gmra.mrb[0].mxu0 %v258
    %v340 = vpop.f32.mrb[0].mxu0
    %v341 = vadd.f32 %v248, %v340
    %v342 = vpop.f32.mrb[0].mxu0
    %343 = vmatprep.mubr.f32.mxu0 0.0
    %344 = vmatmul.mubr.f32.gmra.mrb[0].mxu0 %v260
    %v345 = vpop.f32.mrb[0].mxu0
    %v346 = vadd.f32 %v248, %v345
    %v347 = vpop.f32.mrb[0].mxu0
    %348 = vmatprep.mubr.f32.mxu0 0.0
    %349 = vmatmul.mubr.f32.gmra.mrb[0].mxu0 %v262
    %v350 = vpop.f32.mrb[0].mxu0
    %v351 = vadd.f32 %v248, %v350
    %v352 = vpop.f32.mrb[0].mxu0
    %353 = vdwg.mxu0
    %vm354 = vcmp.gt.f32.partialorder %v331, 0.0
    %vm355 = vcmp.gt.f32.partialorder %v336, 0.0
    %vm356 = vcmp.gt.f32.partialorder %v341, 0.0
    %vm357 = vcmp.gt.f32.partialorder %v346, 0.0
    %vm358 = vcmp.gt.f32.partialorder %v351, 0.0
    %v359 = vmul.f32 %v331, 0.01
    %v360 = vmul.f32 %v336, 0.01
    %v361 = vmul.f32 %v341, 0.01
    %v362 = vmul.f32 %v346, 0.01
    %v363 = vmul.f32 %v351, 0.01
    %v364 = vsel %vm354, %v331, %v359
    %v365 = vsel %vm355, %v336, %v360
    %v366 = vsel %vm356, %v341, %v361
    %v367 = vsel %vm357, %v346, %v362
    %v368 = vsel %vm358, %v351, %v363
    %v372 = vrot.slane %v364, 1
    %v373 = vrot.slane %v365, 1
    %v374 = vsel %vm69, %v372, %v373
    %v375 = vrot.slane %v366, 1
    %v376 = vsel %vm69, %v373, %v375
    %377 = vrot.lane.b32.xlu0 %v374, 8
    %v378 = vpop.permute.xlu0 %377
    %379 = vrot.lane.b32.xlu0 %v376, 8
    %v380 = vpop.permute.xlu0 %379
    %v383 = vrot.slane %v364, 2
    %v384 = vrot.slane %v365, 2
    %v385 = vsel %vm84, %v383, %v384
    %v386 = vrot.slane %v366, 2
    %v387 = vsel %vm84, %v384, %v386
    %388 = vrot.lane.b32.xlu0 %v385, 16
    %v389 = vpop.permute.xlu0 %388
    %390 = vrot.lane.b32.xlu0 %v387, 16
    %v391 = vpop.permute.xlu0 %390
    %v394 = vsel %vm129, %v364, %v378
    %v395 = vsel %vm129, %v365, %v380
    %v396 = vsel %vm133, %v394, %v389
    %v397 = vsel %vm133, %v395, %v391
    %v400 = vrot.slane %v367, 1
    %v401 = vsel %vm69, %v375, %v400
    %v402 = vrot.slane %v368, 1
    %v403 = vsel %vm69, %v400, %v402
    %404 = vrot.lane.b32.xlu0 %v401, 8
    %v405 = vpop.permute.xlu0 %404
    %406 = vrot.lane.b32.xlu0 %v403, 8
    %v407 = vpop.permute.xlu0 %406
    %408 = vrot.lane.b32.xlu0 %v402, 8
    %v409 = vpop.permute.xlu0 %408
    %v413 = vrot.slane %v367, 2
    %v414 = vsel %vm84, %v386, %v413
    %v415 = vrot.slane %v368, 2
    %v416 = vsel %vm84, %v413, %v415
    %417 = vrot.lane.b32.xlu0 %v414, 16
    %v418 = vpop.permute.xlu0 %417
    %419 = vrot.lane.b32.xlu0 %v416, 16
    %v420 = vpop.permute.xlu0 %419
    %421 = vrot.lane.b32.xlu0 %v415, 16
    %v422 = vpop.permute.xlu0 %421
    %v426 = vsel %vm129, %v366, %v405
    %v427 = vsel %vm129, %v367, %v407
    %v428 = vsel %vm129, %v368, %v409
    %v429 = vsel %vm133, %v426, %v418
    %v430 = vsel %vm133, %v427, %v420
    %v431 = vsel %vm133, %v428, %v422
    %v435 = vrot.slane %v429, 2
    %v436 = vrot.slane %v430, 2
    %v437 = vsel %vm84, %v435, %v436
    %v438 = vrot.slane %v431, 2
    %v439 = vsel %vm84, %v436, %v438
    %v441 = vlaneseq
    %v442 = vshrl.u32 %v441, 7
    %v443 = vsub.s32 0, %v442
    %v444 = vrot.slane %v47, %v443
    %v447 = vsel %vm137, %v396, 0
    %v450 = vsel %vm137, %v397, 0
    %v452 = vsel %vm137, %v437, 0
    %v454 = vsel %vm137, %v439, 0
    %456 = vmatprep.subr.mxu0 0.0
    %457 = vmatpush1.msra.mxu0 %v44
    %458 = vmatprep.subr.mxu0 0.0
    %459 = vmatpush1.msra.mxu0 %v45
    %460 = vmatprep.subr.mxu0 0.0
    %461 = vmatpush1.msra.mxu0 %v46
    %462 = vmatprep.subr.mxu0 0.0
    %463 = vmatpush1.msra.mxu0 0.0
    %464 = vmatprep.subr.mxu0 0.0
    %465 = vmatpush1.msra.mxu0 0.0
    %466 = vmatprep.subr.mxu0 0.0
    %467 = vmatpush1.msra.mxu0 0.0
    %468 = vmatprep.subr.mxu0 0.0
    %469 = vmatpush1.msra.mxu0 0.0
    %470 = vmatprep.subr.mxu0 0.0
    %471 = vmatpush1.msra.mxu0 0.0
    %472 = vmatprep.subr.mxu0 0.0
    %473 = vmatpush1.msra.mxu0 0.0
    %474 = vmatprep.subr.mxu0 0.0
    %475 = vmatpush1.msra.mxu0 0.0
    %476 = vmatprep.subr.mxu0 0.0
    %477 = vmatpush1.msra.mxu0 0.0
    %478 = vmatprep.subr.mxu0 0.0
    %479 = vmatpush1.msra.mxu0 0.0
    %480 = vmatprep.subr.mxu0 0.0
    %481 = vmatpush1.msra.mxu0 0.0
    %482 = vmatprep.subr.mxu0 0.0
    %483 = vmatpush1.msra.mxu0 0.0
    %484 = vmatprep.subr.mxu0 0.0
    %485 = vmatpush1.msra.mxu0 0.0
    %486 = vmatprep.subr.mxu0 0.0
    %487 = vmatpush1.msra.mxu0 0.0
    %488 = vmatprep.subr.mxu0 0.0
    %489 = vmatpush1.msra.mxu0 0.0
    %490 = vmatprep.subr.mxu0 0.0
    %491 = vmatpush1.msra.mxu0 0.0
    %492 = vmatprep.subr.mxu0 0.0
    %493 = vmatpush1.msra.mxu0 0.0
    %494 = vmatprep.subr.mxu0 0.0
    %495 = vmatpush1.msra.mxu0 0.0
    %496 = vmatprep.subr.mxu0 0.0
    %497 = vmatpush1.msra.mxu0 0.0
    %498 = vmatprep.subr.mxu0 0.0
    %499 = vmatpush1.msra.mxu0 0.0
    %500 = vmatprep.subr.mxu0 0.0
    %501 = vmatpush1.msra.mxu0 0.0
    %502 = vmatprep.subr.mxu0 0.0
    %503 = vmatpush1.msra.mxu0 0.0
    %504 = vmatprep.subr.mxu0 0.0
    %505 = vmatpush1.msra.mxu0 0.0
    %506 = vmatprep.subr.mxu0 0.0
    %507 = vmatpush1.msra.mxu0 0.0
    %508 = vmatprep.subr.mxu0 0.0
    %509 = vmatpush1.msra.mxu0 0.0
    %510 = vmatprep.subr.mxu0 0.0
    %511 = vmatpush1.msra.mxu0 0.0
    %512 = vmatprep.subr.mxu0 0.0
    %513 = vmatpush1.msra.mxu0 0.0
    %514 = vmatprep.subr.mxu0 0.0
    %515 = vmatpush1.msra.mxu0 0.0
    %516 = vmatprep.subr.mxu0 0.0
    %517 = vmatpush1.msra.mxu0 0.0
    %518 = vmatprep.subr.mxu0 0.0
    %519 = vmatpush1.msra.mxu0 0.0
    %520 = vmatprep.mubr.f32.mxu0 0.0
    %521 = vmatmul.mubr.f32.gmra.mrb[0].mxu0 %v447
    %v522 = vpop.f32.mrb[0].mxu0
    %v523 = vadd.f32 %v444, %v522
    %v524 = vpop.f32.mrb[0].mxu0
    %525 = vmatprep.mubr.f32.mxu0 0.0
    %526 = vmatmul.mubr.f32.gmra.mrb[0].mxu0 %v450
    %v527 = vpop.f32.mrb[0].mxu0
    %v528 = vadd.f32 %v444, %v527
    %v529 = vpop.f32.mrb[0].mxu0
    %530 = vmatprep.mubr.f32.mxu0 0.0
    %531 = vmatmul.mubr.f32.gmra.mrb[0].mxu0 %v452
    %v532 = vpop.f32.mrb[0].mxu0
    %v533 = vadd.f32 %v444, %v532
    %v534 = vpop.f32.mrb[0].mxu0
    %535 = vmatprep.mubr.f32.mxu0 0.0
    %536 = vmatmul.mubr.f32.gmra.mrb[0].mxu0 %v454
    %v537 = vpop.f32.mrb[0].mxu0
    %v538 = vadd.f32 %v444, %v537
    %v539 = vpop.f32.mrb[0].mxu0
    %540 = vdwg.mxu0
    %v541 = vtanh.pop %v523
    %v542 = vtanh.pop %v528
    %v543 = vtanh.pop %v533
    %v544 = vtanh.pop %v538
    %v545 = vmul.f32 %v541, 1.442695
    %v546 = vpow.pop %v545
    %v547 = vmul.f32 %v542, 1.442695
    %v548 = vpow.pop %v547
    %v549 = vmul.f32 %v543, 1.442695
    %v550 = vpow.pop %v549
    %v551 = vmul.f32 %v544, 1.442695
    %v552 = vpow.pop %v551
    %v553 = vmul.f32 %v33, %v546
    %v554 = vmul.f32 %v34, %v548
    %v555 = vmul.f32 %v36, %v550
    %v556 = vmul.f32 %v37, %v552
    %v557 = vld [vmem:[%s5] sm:$0xff]
    %v558 = vld [vmem:[%s5 + $0x8] sm:$0xff]
    %v559 = vld [vmem:[%s5 + $0x10] sm:$0xff]
    %v560 = vld [vmem:[%s5 + $0x18] sm:$0xff]
    %v561 = vld [vmem:[%s5 + $0x20] sm:$0xff]
    %v562 = vld [vmem:[%s6] sm:$0x1]
    %v563 = vld [vmem:[%s7] sm:$0xff]
    %v564 = vld [vmem:[%s7 + $0x8] sm:$0xff]
    %v565 = vld [vmem:[%s7 + $0x10] sm:$0xff]
    %v566 = vld [vmem:[%s8] sm:$0x1]
    %v567 = vlaneseq
    %v568 = vshrl.u32 %v567, 7
    %v569 = vsub.s32 0, %v568
    %v570 = vrot.slane %v553, %v569
    %v571 = vlaneseq
    %v572 = vshrl.u32 %v571, 7
    %v573 = vsub.s32 7, %v572
    %v574 = vrot.slane %v554, %v573
    %v577 = vrot.slane %v553, 5
    %v578 = vrot.slane %v554, 5
    %v579 = vsel %vm58, %v577, %v578
    %v583 = vsel %vm58, %v570, %v577
    %v584 = vsel %vm58, %v578, %v574
    %v587 = vrot.slane %v583, 1
    %v588 = vrot.slane %v579, 1
    %v589 = vsel %vm69, %v587, %v588
    %v590 = vrot.slane %v584, 1
    %v591 = vsel %vm69, %v588, %v590
    %592 = vrot.lane.b32.xlu0 %v589, 8
    %v593 = vpop.permute.xlu0 %592
    %594 = vrot.lane.b32.xlu0 %v591, 8
    %v595 = vpop.permute.xlu0 %594
    %596 = vrot.lane.b32.xlu0 %v590, 8
    %v597 = vpop.permute.xlu0 %596
    %v601 = vrot.slane %v583, 2
    %v602 = vrot.slane %v579, 2
    %v603 = vsel %vm84, %v601, %v602
    %v604 = vrot.slane %v584, 2
    %v605 = vsel %vm84, %v602, %v604
    %606 = vrot.lane.b32.xlu0 %v603, 16
    %v607 = vpop.permute.xlu0 %606
    %608 = vrot.lane.b32.xlu0 %v605, 16
    %v609 = vpop.permute.xlu0 %608
    %610 = vrot.lane.b32.xlu0 %v604, 16
    %v611 = vpop.permute.xlu0 %610
    %v615 = vrot.slane %v583, 3
    %v616 = vrot.slane %v579, 3
    %v617 = vsel %vm99, %v615, %v616
    %v618 = vrot.slane %v584, 3
    %v619 = vsel %vm99, %v616, %v618
    %620 = vrot.lane.b32.xlu0 %v617, 24
    %v621 = vpop.permute.xlu0 %620
    %622 = vrot.lane.b32.xlu0 %v619, 24
    %v623 = vpop.permute.xlu0 %622
    %624 = vrot.lane.b32.xlu0 %v618, 24
    %v625 = vpop.permute.xlu0 %624
    %v629 = vrot.slane %v583, 4
    %v630 = vrot.slane %v579, 4
    %v631 = vsel %vm114, %v629, %v630
    %v632 = vrot.slane %v584, 4
    %v633 = vsel %vm114, %v630, %v632
    %634 = vrot.lane.b32.xlu0 %v631, 32
    %v635 = vpop.permute.xlu0 %634
    %636 = vrot.lane.b32.xlu0 %v633, 32
    %v637 = vpop.permute.xlu0 %636
    %638 = vrot.lane.b32.xlu0 %v632, 32
    %v639 = vpop.permute.xlu0 %638
    %v643 = vsel %vm129, %v583, %v593
    %v644 = vsel %vm129, %v579, %v595
    %v645 = vsel %vm129, %v584, %v597
    %v646 = vsel %vm133, %v643, %v607
    %v647 = vsel %vm133, %v644, %v609
    %v648 = vsel %vm133, %v645, %v611
    %v649 = vsel %vm137, %v646, %v621
    %v650 = vsel %vm137, %v647, %v623
    %v651 = vsel %vm137, %v648, %v625
    %v652 = vsel %vm141, %v649, %v635
    %v653 = vsel %vm141, %v650, %v637
    %v654 = vsel %vm141, %v651, %v639
    %v655 = vlaneseq
    %v656 = vshrl.u32 %v655, 7
    %v657 = vsub.s32 0, %v656
    %v658 = vrot.slane %v555, %v657
    %v659 = vlaneseq
    %v660 = vshrl.u32 %v659, 7
    %v661 = vsub.s32 7, %v660
    %v662 = vrot.slane %v556, %v661
    %v665 = vrot.slane %v555, 5
    %v666 = vrot.slane %v556, 5
    %v667 = vsel %vm58, %v665, %v666
    %v671 = vsel %vm58, %v658, %v665
    %v672 = vsel %vm58, %v666, %v662
    %v675 = vrot.slane %v671, 1
    %v676 = vrot.slane %v667, 1
    %v677 = vsel %vm69, %v675, %v676
    %v678 = vrot.slane %v672, 1
    %v679 = vsel %vm69, %v676, %v678
    %680 = vrot.lane.b32.xlu0 %v677, 8
    %v681 = vpop.permute.xlu0 %680
    %682 = vrot.lane.b32.xlu0 %v679, 8
    %v683 = vpop.permute.xlu0 %682
    %684 = vrot.lane.b32.xlu0 %v678, 8
    %v685 = vpop.permute.xlu0 %684
    %v689 = vrot.slane %v671, 2
    %v690 = vrot.slane %v667, 2
    %v691 = vsel %vm84, %v689, %v690
    %v692 = vrot.slane %v672, 2
    %v693 = vsel %vm84, %v690, %v692
    %694 = vrot.lane.b32.xlu0 %v691, 16
    %v695 = vpop.permute.xlu0 %694
    %696 = vrot.lane.b32.xlu0 %v693, 16
    %v697 = vpop.permute.xlu0 %696
    %698 = vrot.lane.b32.xlu0 %v692, 16
    %v699 = vpop.permute.xlu0 %698
    %v703 = vrot.slane %v671, 3
    %v704 = vrot.slane %v667, 3
    %v705 = vsel %vm99, %v703, %v704
    %v706 = vrot.slane %v672, 3
    %v707 = vsel %vm99, %v704, %v706
    %708 = vrot.lane.b32.xlu0 %v705, 24
    %v709 = vpop.permute.xlu0 %708
    %710 = vrot.lane.b32.xlu0 %v707, 24
    %v711 = vpop.permute.xlu0 %710
    %712 = vrot.lane.b32.xlu0 %v706, 24
    %v713 = vpop.permute.xlu0 %712
    %v717 = vrot.slane %v671, 4
    %v718 = vrot.slane %v667, 4
    %v719 = vsel %vm114, %v717, %v718
    %v720 = vrot.slane %v672, 4
    %v721 = vsel %vm114, %v718, %v720
    %722 = vrot.lane.b32.xlu0 %v719, 32
    %v723 = vpop.permute.xlu0 %722
    %724 = vrot.lane.b32.xlu0 %v721, 32
    %v725 = vpop.permute.xlu0 %724
    %726 = vrot.lane.b32.xlu0 %v720, 32
    %v727 = vpop.permute.xlu0 %726
    %v731 = vsel %vm129, %v671, %v681
    %v732 = vsel %vm129, %v667, %v683
    %v733 = vsel %vm129, %v672, %v685
    %v734 = vsel %vm133, %v731, %v695
    %v735 = vsel %vm133, %v732, %v697
    %v736 = vsel %vm133, %v733, %v699
    %v737 = vsel %vm137, %v734, %v709
    %v738 = vsel %vm137, %v735, %v711
    %v739 = vsel %vm137, %v736, %v713
    %v740 = vsel %vm141, %v737, %v723
    %v741 = vsel %vm141, %v738, %v725
    %v742 = vsel %vm141, %v739, %v727
    %v746 = vrot.slane %v740, 6
    %v747 = vrot.slane %v741, 6
    %v748 = vsel %vm236, %v746, %v747
    %v749 = vrot.slane %v742, 6
    %v750 = vsel %vm236, %v747, %v749
    %v752 = vsel %vm236, %v654, %v746
    %v754 = vlaneseq
    %v755 = vshrl.u32 %v754, 7
    %v756 = vsub.s32 0, %v755
    %v757 = vrot.slane %v562, %v756
    %v760 = vsel %vm250, %v652, 0
    %v763 = vsel %vm250, %v653, 0
    %v766 = vsel %vm250, %v752, 0
    %v768 = vsel %vm250, %v748, 0
    %v770 = vsel %vm250, %v750, 0
    %772 = vmatprep.subr.mxu0 0.0
    %773 = vmatpush1.msra.mxu0 %v557
    %774 = vmatprep.subr.mxu0 0.0
    %775 = vmatpush1.msra.mxu0 %v558
    %776 = vmatprep.subr.mxu0 0.0
    %777 = vmatpush1.msra.mxu0 %v559
    %778 = vmatprep.subr.mxu0 0.0
    %779 = vmatpush1.msra.mxu0 %v560
    %780 = vmatprep.subr.mxu0 0.0
    %781 = vmatpush1.msra.mxu0 %v561
    %782 = vmatprep.subr.mxu0 0.0
    %783 = vmatpush1.msra.mxu0 0.0
    %784 = vmatprep.subr.mxu0 0.0
    %785 = vmatpush1.msra.mxu0 0.0
    %786 = vmatprep.subr.mxu0 0.0
    %787 = vmatpush1.msra.mxu0 0.0
    %788 = vmatprep.subr.mxu0 0.0
    %789 = vmatpush1.msra.mxu0 0.0
    %790 = vmatprep.subr.mxu0 0.0
    %791 = vmatpush1.msra.mxu0 0.0
    %792 = vmatprep.subr.mxu0 0.0
    %793 = vmatpush1.msra.mxu0 0.0
    %794 = vmatprep.subr.mxu0 0.0
    %795 = vmatpush1.msra.mxu0 0.0
    %796 = vmatprep.subr.mxu0 0.0
    %797 = vmatpush1.msra.mxu0 0.0
    %798 = vmatprep.subr.mxu0 0.0
    %799 = vmatpush1.msra.mxu0 0.0
    %800 = vmatprep.subr.mxu0 0.0
    %801 = vmatpush1.msra.mxu0 0.0
    %802 = vmatprep.subr.mxu0 0.0
    %803 = vmatpush1.msra.mxu0 0.0
    %804 = vmatprep.subr.mxu0 0.0
    %805 = vmatpush1.msra.mxu0 0.0
    %806 = vmatprep.subr.mxu0 0.0
    %807 = vmatpush1.msra.mxu0 0.0
    %808 = vmatprep.subr.mxu0 0.0
    %809 = vmatpush1.msra.mxu0 0.0
    %810 = vmatprep.subr.mxu0 0.0
    %811 = vmatpush1.msra.mxu0 0.0
    %812 = vmatprep.subr.mxu0 0.0
    %813 = vmatpush1.msra.mxu0 0.0
    %814 = vmatprep.subr.mxu0 0.0
    %815 = vmatpush1.msra.mxu0 0.0
    %816 = vmatprep.subr.mxu0 0.0
    %817 = vmatpush1.msra.mxu0 0.0
    %818 = vmatprep.subr.mxu0 0.0
    %819 = vmatpush1.msra.mxu0 0.0
    %820 = vmatprep.subr.mxu0 0.0
    %821 = vmatpush1.msra.mxu0 0.0
    %822 = vmatprep.subr.mxu0 0.0
    %823 = vmatpush1.msra.mxu0 0.0
    %824 = vmatprep.subr.mxu0 0.0
    %825 = vmatpush1.msra.mxu0 0.0
    %826 = vmatprep.subr.mxu0 0.0
    %827 = vmatpush1.msra.mxu0 0.0
    %828 = vmatprep.subr.mxu0 0.0
    %829 = vmatpush1.msra.mxu0 0.0
    %830 = vmatprep.subr.mxu0 0.0
    %831 = vmatpush1.msra.mxu0 0.0
    %832 = vmatprep.subr.mxu0 0.0
    %833 = vmatpush1.msra.mxu0 0.0
    %834 = vmatprep.subr.mxu0 0.0
    %835 = vmatpush1.msra.mxu0 0.0
    %836 = vmatprep.mubr.f32.mxu0 0.0
    %837 = vmatmul.mubr.f32.gmra.mrb[0].mxu0 %v760
    %v838 = vpop.f32.mrb[0].mxu0
    %v839 = vadd.f32 %v757, %v838
    %v840 = vpop.f32.mrb[0].mxu0
    %841 = vmatprep.mubr.f32.mxu0 0.0
    %842 = vmatmul.mubr.f32.gmra.mrb[0].mxu0 %v763
    %v843 = vpop.f32.mrb[0].mxu0
    %v844 = vadd.f32 %v757, %v843
    %v845 = vpop.f32.mrb[0].mxu0
    %846 = vmatprep.mubr.f32.mxu0 0.0
    %847 = vmatmul.mubr.f32.gmra.mrb[0].mxu0 %v766
    %v848 = vpop.f32.mrb[0].mxu0
    %v849 = vadd.f32 %v757, %v848
    %v850 = vpop.f32.mrb[0].mxu0
    %851 = vmatprep.mubr.f32.mxu0 0.0
    %852 = vmatmul.mubr.f32.gmra.mrb[0].mxu0 %v768
    %v853 = vpop.f32.mrb[0].mxu0
    %v854 = vadd.f32 %v757, %v853
    %v855 = vpop.f32.mrb[0].mxu0
    %856 = vmatprep.mubr.f32.mxu0 0.0
    %857 = vmatmul.mubr.f32.gmra.mrb[0].mxu0 %v770
    %v858 = vpop.f32.mrb[0].mxu0
    %v859 = vadd.f32 %v757, %v858
    %v860 = vpop.f32.mrb[0].mxu0
    %861 = vdwg.mxu0
    %vm862 = vcmp.gt.f32.partialorder %v839, 0.0
    %vm863 = vcmp.gt.f32.partialorder %v844, 0.0
    %vm864 = vcmp.gt.f32.partialorder %v849, 0.0
    %vm865 = vcmp.gt.f32.partialorder %v854, 0.0
    %vm866 = vcmp.gt.f32.partialorder %v859, 0.0
    %v867 = vmul.f32 %v839, 0.01
    %v868 = vmul.f32 %v844, 0.01
    %v869 = vmul.f32 %v849, 0.01
    %v870 = vmul.f32 %v854, 0.01
    %v871 = vmul.f32 %v859, 0.01
    %v872 = vsel %vm862, %v839, %v867
    %v873 = vsel %vm863, %v844, %v868
    %v874 = vsel %vm864, %v849, %v869
    %v875 = vsel %vm865, %v854, %v870
    %v876 = vsel %vm866, %v859, %v871
    %v880 = vrot.slane %v872, 1
    %v881 = vrot.slane %v873, 1
    %v882 = vsel %vm69, %v880, %v881
    %v883 = vrot.slane %v874, 1
    %v884 = vsel %vm69, %v881, %v883
    %885 = vrot.lane.b32.xlu0 %v882, 8
    %v886 = vpop.permute.xlu0 %885
    %887 = vrot.lane.b32.xlu0 %v884, 8
    %v888 = vpop.permute.xlu0 %887
    %v891 = vrot.slane %v872, 2
    %v892 = vrot.slane %v873, 2
    %v893 = vsel %vm84, %v891, %v892
    %v894 = vrot.slane %v874, 2
    %v895 = vsel %vm84, %v892, %v894
    %896 = vrot.lane.b32.xlu0 %v893, 16
    %v897 = vpop.permute.xlu0 %896
    %898 = vrot.lane.b32.xlu0 %v895, 16
    %v899 = vpop.permute.xlu0 %898
    %v902 = vsel %vm129, %v872, %v886
    %v903 = vsel %vm129, %v873, %v888
    %v904 = vsel %vm133, %v902, %v897
    %v905 = vsel %vm133, %v903, %v899
    %v908 = vrot.slane %v875, 1
    %v909 = vsel %vm69, %v883, %v908
    %v910 = vrot.slane %v876, 1
    %v911 = vsel %vm69, %v908, %v910
    %912 = vrot.lane.b32.xlu0 %v909, 8
    %v913 = vpop.permute.xlu0 %912
    %914 = vrot.lane.b32.xlu0 %v911, 8
    %v915 = vpop.permute.xlu0 %914
    %916 = vrot.lane.b32.xlu0 %v910, 8
    %v917 = vpop.permute.xlu0 %916
    %v921 = vrot.slane %v875, 2
    %v922 = vsel %vm84, %v894, %v921
    %v923 = vrot.slane %v876, 2
    %v924 = vsel %vm84, %v921, %v923
    %925 = vrot.lane.b32.xlu0 %v922, 16
    %v926 = vpop.permute.xlu0 %925
    %927 = vrot.lane.b32.xlu0 %v924, 16
    %v928 = vpop.permute.xlu0 %927
    %929 = vrot.lane.b32.xlu0 %v923, 16
    %v930 = vpop.permute.xlu0 %929
    %v934 = vsel %vm129, %v874, %v913
    %v935 = vsel %vm129, %v875, %v915
    %v936 = vsel %vm129, %v876, %v917
    %v937 = vsel %vm133, %v934, %v926
    %v938 = vsel %vm133, %v935, %v928
    %v939 = vsel %vm133, %v936, %v930
    %v943 = vrot.slane %v937, 2
    %v944 = vrot.slane %v938, 2
    %v945 = vsel %vm84, %v943, %v944
    %v946 = vrot.slane %v939, 2
    %v947 = vsel %vm84, %v944, %v946
    %v949 = vlaneseq
    %v950 = vshrl.u32 %v949, 7
    %v951 = vsub.s32 0, %v950
    %v952 = vrot.slane %v566, %v951
    %v955 = vsel %vm137, %v904, 0
    %v958 = vsel %vm137, %v905, 0
    %v960 = vsel %vm137, %v945, 0
    %v962 = vsel %vm137, %v947, 0
    %964 = vmatprep.subr.mxu0 0.0
    %965 = vmatpush1.msra.mxu0 %v563
    %966 = vmatprep.subr.mxu0 0.0
    %967 = vmatpush1.msra.mxu0 %v564
    %968 = vmatprep.subr.mxu0 0.0
    %969 = vmatpush1.msra.mxu0 %v565
    %970 = vmatprep.subr.mxu0 0.0
    %971 = vmatpush1.msra.mxu0 0.0
    %972 = vmatprep.subr.mxu0 0.0
    %973 = vmatpush1.msra.mxu0 0.0
    %974 = vmatprep.subr.mxu0 0.0
    %975 = vmatpush1.msra.mxu0 0.0
    %976 = vmatprep.subr.mxu0 0.0
    %977 = vmatpush1.msra.mxu0 0.0
    %978 = vmatprep.subr.mxu0 0.0
    %979 = vmatpush1.msra.mxu0 0.0
    %980 = vmatprep.subr.mxu0 0.0
    %981 = vmatpush1.msra.mxu0 0.0
    %982 = vmatprep.subr.mxu0 0.0
    %983 = vmatpush1.msra.mxu0 0.0
    %984 = vmatprep.subr.mxu0 0.0
    %985 = vmatpush1.msra.mxu0 0.0
    %986 = vmatprep.subr.mxu0 0.0
    %987 = vmatpush1.msra.mxu0 0.0
    %988 = vmatprep.subr.mxu0 0.0
    %989 = vmatpush1.msra.mxu0 0.0
    %990 = vmatprep.subr.mxu0 0.0
    %991 = vmatpush1.msra.mxu0 0.0
    %992 = vmatprep.subr.mxu0 0.0
    %993 = vmatpush1.msra.mxu0 0.0
    %994 = vmatprep.subr.mxu0 0.0
    %995 = vmatpush1.msra.mxu0 0.0
    %996 = vmatprep.subr.mxu0 0.0
    %997 = vmatpush1.msra.mxu0 0.0
    %998 = vmatprep.subr.mxu0 0.0
    %999 = vmatpush1.msra.mxu0 0.0
    %1000 = vmatprep.subr.mxu0 0.0
    %1001 = vmatpush1.msra.mxu0 0.0
    %1002 = vmatprep.subr.mxu0 0.0
    %1003 = vmatpush1.msra.mxu0 0.0
    %1004 = vmatprep.subr.mxu0 0.0
    %1005 = vmatpush1.msra.mxu0 0.0
    %1006 = vmatprep.subr.mxu0 0.0
    %1007 = vmatpush1.msra.mxu0 0.0
    %1008 = vmatprep.subr.mxu0 0.0
    %1009 = vmatpush1.msra.mxu0 0.0
    %1010 = vmatprep.subr.mxu0 0.0
    %1011 = vmatpush1.msra.mxu0 0.0
    %1012 = vmatprep.subr.mxu0 0.0
    %1013 = vmatpush1.msra.mxu0 0.0
    %1014 = vmatprep.subr.mxu0 0.0
    %1015 = vmatpush1.msra.mxu0 0.0
    %1016 = vmatprep.subr.mxu0 0.0
    %1017 = vmatpush1.msra.mxu0 0.0
    %1018 = vmatprep.subr.mxu0 0.0
    %1019 = vmatpush1.msra.mxu0 0.0
    %1020 = vmatprep.subr.mxu0 0.0
    %1021 = vmatpush1.msra.mxu0 0.0
    %1022 = vmatprep.subr.mxu0 0.0
    %1023 = vmatpush1.msra.mxu0 0.0
    %1024 = vmatprep.subr.mxu0 0.0
    %1025 = vmatpush1.msra.mxu0 0.0
    %1026 = vmatprep.subr.mxu0 0.0
    %1027 = vmatpush1.msra.mxu0 0.0
    %1028 = vmatprep.mubr.f32.mxu0 0.0
    %1029 = vmatmul.mubr.f32.gmra.mrb[0].mxu0 %v955
    %v1030 = vpop.f32.mrb[0].mxu0
    %v1031 = vadd.f32 %v952, %v1030
    %v1032 = vpop.f32.mrb[0].mxu0
    %1033 = vmatprep.mubr.f32.mxu0 0.0
    %1034 = vmatmul.mubr.f32.gmra.mrb[0].mxu0 %v958
    %v1035 = vpop.f32.mrb[0].mxu0
    %v1036 = vadd.f32 %v952, %v1035
    %v1037 = vpop.f32.mrb[0].mxu0
    %1038 = vmatprep.mubr.f32.mxu0 0.0
    %1039 = vmatmul.mubr.f32.gmra.mrb[0].mxu0 %v960
    %v1040 = vpop.f32.mrb[0].mxu0
    %v1041 = vadd.f32 %v952, %v1040
    %v1042 = vpop.f32.mrb[0].mxu0
    %1043 = vmatprep.mubr.f32.mxu0 0.0
    %1044 = vmatmul.mubr.f32.gmra.mrb[0].mxu0 %v962
    %v1045 = vpop.f32.mrb[0].mxu0
    %v1046 = vadd.f32 %v952, %v1045
    %v1047 = vpop.f32.mrb[0].mxu0
    %1048 = vdwg.mxu0
    %v1049 = vtanh.pop %v1031
    %v1050 = vtanh.pop %v1036
    %v1051 = vtanh.pop %v1041
    %v1052 = vtanh.pop %v1046
    %v1053 = vadd.f32 %v553, %v1049
    %v1054 = vadd.f32 %v554, %v1050
    %v1055 = vadd.f32 %v555, %v1051
    %v1056 = vadd.f32 %v556, %v1052
    %v1058 = vrot.slane %v1053, 1
    %1059 = vrot.lane.b32.xlu0 %v1058, 8
    %v1060 = vpop.permute.xlu0 %1059
    %v1062 = vrot.slane %v1053, 2
    %1063 = vrot.lane.b32.xlu0 %v1062, 16
    %v1064 = vpop.permute.xlu0 %1063
    %v1066 = vrot.slane %v1053, 3
    %1067 = vrot.lane.b32.xlu0 %v1066, 24
    %v1068 = vpop.permute.xlu0 %1067
    %v1070 = vrot.slane %v1053, 4
    %1071 = vrot.lane.b32.xlu0 %v1070, 32
    %v1072 = vpop.permute.xlu0 %1071
    %v1074 = vrot.slane %v1053, 5
    %1075 = vrot.lane.b32.xlu0 %v1074, 40
    %v1076 = vpop.permute.xlu0 %1075
    %v1078 = vrot.slane %v1053, 6
    %1079 = vrot.lane.b32.xlu0 %v1078, 48
    %v1080 = vpop.permute.xlu0 %1079
    %v1082 = vrot.slane %v1053, 7
    %1083 = vrot.lane.b32.xlu0 %v1082, 56
    %v1084 = vpop.permute.xlu0 %1083
    %1087 = vrot.lane.b32.xlu0 %v1054, 64
    %v1088 = vpop.permute.xlu0 %1087
    %v1090 = vrot.slane %v1054, 1
    %1091 = vrot.lane.b32.xlu0 %v1090, 72
    %v1092 = vpop.permute.xlu0 %1091
    %v1094 = vrot.slane %v1054, 2
    %1095 = vrot.lane.b32.xlu0 %v1094, 80
    %v1096 = vpop.permute.xlu0 %1095
    %v1098 = vrot.slane %v1054, 3
    %1099 = vrot.lane.b32.xlu0 %v1098, 88
    %v1100 = vpop.permute.xlu0 %1099
    %v1102 = vrot.slane %v1054, 4
    %1103 = vrot.lane.b32.xlu0 %v1102, 96
    %v1104 = vpop.permute.xlu0 %1103
    %v1106 = vrot.slane %v1054, 5
    %1107 = vrot.lane.b32.xlu0 %v1106, 104
    %v1108 = vpop.permute.xlu0 %1107
    %v1110 = vrot.slane %v1054, 6
    %1111 = vrot.lane.b32.xlu0 %v1110, 112
    %v1112 = vpop.permute.xlu0 %1111
    %v1114 = vrot.slane %v1054, 7
    %1115 = vrot.lane.b32.xlu0 %v1114, 120
    %v1116 = vpop.permute.xlu0 %1115
    %v1118 = vsel %vm129, %v1053, %v1060
    %v1119 = vsel %vm133, %v1118, %v1064
    %v1120 = vsel %vm137, %v1119, %v1068
    %v1121 = vsel %vm141, %v1120, %v1072
    %v1122 = vsel %vm250, %v1121, %v1076
    %vm1123 = vcmask 392192
    %v1124 = vsel %vm1123, %v1122, %v1080
    %vm1125 = vcmask 457728
    %v1126 = vsel %vm1125, %v1124, %v1084
    %vm1127 = vcmask 523264
    %v1128 = vsel %vm1127, %v1126, %v1088
    %vm1129 = vcmask 588800
    %v1130 = vsel %vm1129, %v1128, %v1092
    %vm1131 = vcmask 654336
    %v1132 = vsel %vm1131, %v1130, %v1096
    %vm1133 = vcmask 719872
    %v1134 = vsel %vm1133, %v1132, %v1100
    %vm1135 = vcmask 785408
    %v1136 = vsel %vm1135, %v1134, %v1104
    %vm1137 = vcmask 850944
    %v1138 = vsel %vm1137, %v1136, %v1108
    %vm1139 = vcmask 916480
    %v1140 = vsel %vm1139, %v1138, %v1112
    %vm1141 = vcmask 982016
    %v1142 = vsel %vm1141, %v1140, %v1116
    %v1144 = vrot.slane %v1055, 1
    %1145 = vrot.lane.b32.xlu0 %v1144, 8
    %v1146 = vpop.permute.xlu0 %1145
    %v1148 = vrot.slane %v1055, 2
    %1149 = vrot.lane.b32.xlu0 %v1148, 16
    %v1150 = vpop.permute.xlu0 %1149
    %v1152 = vrot.slane %v1055, 3
    %1153 = vrot.lane.b32.xlu0 %v1152, 24
    %v1154 = vpop.permute.xlu0 %1153
    %v1156 = vrot.slane %v1055, 4
    %1157 = vrot.lane.b32.xlu0 %v1156, 32
    %v1158 = vpop.permute.xlu0 %1157
    %v1160 = vrot.slane %v1055, 5
    %1161 = vrot.lane.b32.xlu0 %v1160, 40
    %v1162 = vpop.permute.xlu0 %1161
    %v1164 = vrot.slane %v1055, 6
    %1165 = vrot.lane.b32.xlu0 %v1164, 48
    %v1166 = vpop.permute.xlu0 %1165
    %v1168 = vrot.slane %v1055, 7
    %1169 = vrot.lane.b32.xlu0 %v1168, 56
    %v1170 = vpop.permute.xlu0 %1169
    %1173 = vrot.lane.b32.xlu0 %v1056, 64
    %v1174 = vpop.permute.xlu0 %1173
    %v1176 = vrot.slane %v1056, 1
    %1177 = vrot.lane.b32.xlu0 %v1176, 72
    %v1178 = vpop.permute.xlu0 %1177
    %v1180 = vrot.slane %v1056, 2
    %1181 = vrot.lane.b32.xlu0 %v1180, 80
    %v1182 = vpop.permute.xlu0 %1181
    %v1184 = vrot.slane %v1056, 3
    %1185 = vrot.lane.b32.xlu0 %v1184, 88
    %v1186 = vpop.permute.xlu0 %1185
    %v1188 = vrot.slane %v1056, 4
    %1189 = vrot.lane.b32.xlu0 %v1188, 96
    %v1190 = vpop.permute.xlu0 %1189
    %v1192 = vrot.slane %v1056, 5
    %1193 = vrot.lane.b32.xlu0 %v1192, 104
    %v1194 = vpop.permute.xlu0 %1193
    %v1196 = vrot.slane %v1056, 6
    %1197 = vrot.lane.b32.xlu0 %v1196, 112
    %v1198 = vpop.permute.xlu0 %1197
    %v1200 = vrot.slane %v1056, 7
    %1201 = vrot.lane.b32.xlu0 %v1200, 120
    %v1202 = vpop.permute.xlu0 %1201
    %v1204 = vsel %vm129, %v1055, %v1146
    %v1205 = vsel %vm133, %v1204, %v1150
    %v1206 = vsel %vm137, %v1205, %v1154
    %v1207 = vsel %vm141, %v1206, %v1158
    %v1208 = vsel %vm250, %v1207, %v1162
    %v1209 = vsel %vm1123, %v1208, %v1166
    %v1210 = vsel %vm1125, %v1209, %v1170
    %v1211 = vsel %vm1127, %v1210, %v1174
    %v1212 = vsel %vm1129, %v1211, %v1178
    %v1213 = vsel %vm1131, %v1212, %v1182
    %v1214 = vsel %vm1133, %v1213, %v1186
    %v1215 = vsel %vm1135, %v1214, %v1190
    %v1216 = vsel %vm1137, %v1215, %v1194
    %v1217 = vsel %vm1139, %v1216, %v1198
    %v1218 = vsel %vm1141, %v1217, %v1202
    %v1220 = vrot.slane %v1218, 7
    %vm1222 = vcmask 1040384
    %v1223 = vsel %vm1222, %v1142, %v1220
    %1224 = vst [vmem:[#allocation2] sm:$0x3] %v1223
    // Predicated region
    $region38: #{tpu_custom_call.1} parent=1 // pred_check
      _
    $region39: #{tpu_custom_call.1} parent=1 // pred_check_branch
      %1226 = sbr.rel (0) target = $region41
    $region40: #{tpu_custom_call.1} parent=1 // pred_region
      %s1228 = ssub.s32 32, 32
      %1229 = vsyncadd [#allocation3], %s1228
      %s1231 = sshll.u32 [#allocation2], 4
      %s1232 = int_to_ptr.vmem [resolvable:$true] %s1231
      %1234 = dma.vmem_to_hbm [thread:$0]  %s1232, 32, %s9, [#allocation3]
    $region41: #{tpu_custom_call.1} parent=1 // pred_fallthru
      _
    // Predicated region
    $region42: #{tpu_custom_call.1} parent=1 // pred_check
      _
    $region43: #{tpu_custom_call.1} parent=1 // pred_check_branch
      %1236 = sbr.rel (0) target = $region45
    $region44: #{tpu_custom_call.1} parent=1 // pred_region
      %1237 = dma.done [#allocation3], 32
    $region45: #{tpu_custom_call.1} parent=1 // pred_fallthru
      _
    %1238 = vsyncpa [#allocation3], 1

</llo_original>
